<compile_context>
chip_gen: v5e
topology: v5e:2x2
jax: 0.10.0
libtpu: 0.0.40
codegen_flags: <defaults>
</compile_context>

<pallas_src>
import jax
import jax.numpy as jnp
from jax.experimental import pallas as pl
from jax.experimental.pallas import tpu as pltpu


def _lstm_head_kernel(gx_ref, h0_ref, c0_ref, whh_ref, wlin_ref, blin_ref,
                      out_ref, h_sc, c_sc, hist_sc):
    """One grid step = T_TILE timesteps of the LSTM recurrence + linear head.

    gx_ref  : (T_TILE, 4, batch, hidden) precomputed x@W_ih^T + b_ih + b_hh,
              time-major, split per gate (i, f, g, o) so every gate tensor is
              lane-aligned.
    h0/c0   : (batch, hidden)            initial state (used only at block 0)
    whh_ref : (4, hidden, hidden)        per-gate recurrent weights, transposed
    wlin_ref: (1, hidden)                linear head weight row
    blin_ref: (1,)   [SMEM]              linear head bias scalar
    out_ref : (batch, T_TILE)            sigmoid(logits) slab for this block
    h_sc/c_sc: (batch, hidden)           persistent VMEM carry across blocks
    hist_sc : (T_TILE, batch, hidden)    per-step hidden-state history slab
    """
    blk = pl.program_id(0)

    @pl.when(blk == 0)
    def _():
        h_sc[...] = h0_ref[...]
        c_sc[...] = c0_ref[...]

    t_tile = hist_sc.shape[0]

    # Loop-invariant weight loads, hoisted out of the recurrence.
    w_i = whh_ref[0]          # (hidden, hidden)
    w_f = whh_ref[1]
    w_g = whh_ref[2]
    w_o = whh_ref[3]

    def step(t, carry):
        h, c = carry
        gx_t = gx_ref[t]      # (4, batch, hidden) -- one load, then free slices
        i_g = jax.nn.sigmoid(
            gx_t[0] + jnp.dot(h, w_i, preferred_element_type=jnp.float32))
        f_g = jax.nn.sigmoid(
            gx_t[1] + jnp.dot(h, w_f, preferred_element_type=jnp.float32))
        g_g = jnp.tanh(
            gx_t[2] + jnp.dot(h, w_g, preferred_element_type=jnp.float32))
        o_g = jax.nn.sigmoid(
            gx_t[3] + jnp.dot(h, w_o, preferred_element_type=jnp.float32))
        c = f_g * c + i_g * g_g
        h = o_g * jnp.tanh(c)
        hist_sc[t] = h        # stage h; head is computed after the loop
        return h, c

    h, c = jax.lax.fori_loop(0, t_tile, step, (h_sc[...], c_sc[...]),
                             unroll=min(8, t_tile))

    # Write the carry back once per block, not once per timestep.
    h_sc[...] = h
    c_sc[...] = c

    # Shared linear head + bias + sigmoid, once for the whole block.
    hist = hist_sc[...]                               # (t_tile, batch, hidden)
    w_lin = wlin_ref[...]                             # (1, hidden)
    logits_tb = jnp.sum(hist * w_lin, axis=-1)        # (t_tile, batch)  VPU+XLU
    logits_bt = jnp.transpose(logits_tb) + blin_ref[0]  # (batch, t_tile)
    out_ref[...] = jax.nn.sigmoid(logits_bt).astype(out_ref.dtype)


def rgan_discriminator_forward(x, h0, c0, params):
    """x: (batch, seq, input_size) float32, PyTorch batch_first layout.
    h0, c0: (batch, hidden) initial LSTM state (num_layers == 1).
    Returns (batch, seq, 1) = sigmoid(Linear(LSTM(x)))."""
    batch, seq, input_size = x.shape
    hidden = params["w_hh"].shape[1]

    # ---- Hoisted input projection: one big matmul over all timesteps. ----
    # gx[t, b, :] = x[b, t, :] @ W_ih^T + (b_ih + b_hh), time-major.
    # TODO(synk): at long sequences, measure keeping gx batch-major to avoid
    #             the extra HBM round trip of the transpose.
    bias = (params["b_ih"] + params["b_hh"]).astype(jnp.float32)
    gx = jnp.einsum("bti,gi->tbg", x, params["w_ih"]) + bias   # (seq, batch, 4H)
    # Split per gate so every in-kernel gate tensor is lane-aligned.
    gx = gx.reshape(seq, batch, 4, hidden).transpose(0, 2, 1, 3)  # (seq,4,B,H)

    # Per-gate recurrent weights, transposed: whh[g] = W_hh_g.T (gate order i,f,g,o)
    whh = params["w_hh"].reshape(4, hidden, hidden).transpose(0, 2, 1)

    wlin = params["w_lin"].reshape(1, hidden)                  # (1, hidden)
    blin = params["b_lin"].reshape(1).astype(jnp.float32)      # (1,) scalar -> SMEM

    # ---- Time blocking: whole sequence in one kernel invocation if it fits. ----
    t_tile = seq if seq <= 128 else 128
    n_blocks = pl.cdiv(seq, t_tile)
    seq_p = n_blocks * t_tile
    if seq_p != seq:
        gx = jnp.pad(gx, ((0, seq_p - seq), (0, 0), (0, 0), (0, 0)))

    out = pl.pallas_call(
        _lstm_head_kernel,
        out_shape=jax.ShapeDtypeStruct((batch, seq_p), x.dtype),
        grid_spec=pltpu.PrefetchScalarGridSpec(
            num_scalar_prefetch=0,
            grid=(n_blocks,),
            in_specs=[
                pl.BlockSpec((t_tile, 4, batch, hidden), lambda i: (i, 0, 0, 0)),
                pl.BlockSpec((batch, hidden), lambda i: (0, 0)),
                pl.BlockSpec((batch, hidden), lambda i: (0, 0)),
                pl.BlockSpec((4, hidden, hidden), lambda i: (0, 0, 0)),
                pl.BlockSpec((1, hidden), lambda i: (0, 0)),
                pl.BlockSpec(memory_space=pltpu.MemorySpace.SMEM),  # b_lin scalar
            ],
            out_specs=pl.BlockSpec((batch, t_tile), lambda i: (0, i)),
            scratch_shapes=[
                pltpu.VMEM((batch, hidden), jnp.float32),            # h carry
                pltpu.VMEM((batch, hidden), jnp.float32),            # c carry
                pltpu.VMEM((t_tile, batch, hidden), jnp.float32),    # h history
            ],
        ),
        compiler_params=pltpu.CompilerParams(
            dimension_semantics=("arbitrary",)),            # sequential recurrence
    )(gx, h0, c0, whh, wlin, blin)

    out = out[:, :seq]                                          # drop time padding
    return out.reshape(batch, seq, 1)                           # (B, T, 1)


def _reference_forward(x, h0, c0, params):
    """Pure-JAX reference matching torch nn.LSTM(batch_first) + Linear + sigmoid."""
    w_ih, w_hh = params["w_ih"], params["w_hh"]
    b = params["b_ih"] + params["b_hh"]
    hdim = w_hh.shape[1]

    def step(carry, x_t):
        h, c = carry
        gates = x_t @ w_ih.T + h @ w_hh.T + b
        i = jax.nn.sigmoid(gates[:, 0 * hdim:1 * hdim])
        f = jax.nn.sigmoid(gates[:, 1 * hdim:2 * hdim])
        g = jnp.tanh(gates[:, 2 * hdim:3 * hdim])
        o = jax.nn.sigmoid(gates[:, 3 * hdim:4 * hdim])
        c = f * c + i * g
        h = o * jnp.tanh(c)
        return (h, c), h

    _, hs = jax.lax.scan(step, (h0, c0), jnp.transpose(x, (1, 0, 2)))
    hs = jnp.transpose(hs, (1, 0, 2))                           # (batch, seq, hidden)
    y = hs @ params["w_lin"].T + params["b_lin"]
    return jax.nn.sigmoid(y)


if __name__ == "__main__":
    batch, seq, input_size, hidden = 2, 8, 4, 32

    key = jax.random.PRNGKey(0)
    ks = jax.random.split(key, 10)
    scale = 1.0 / jnp.sqrt(jnp.float32(hidden))

    # Deterministic synthetic parameters (shapes follow nn.LSTM / nn.Linear).
    params = {
        "w_ih":  jax.random.uniform(ks[0], (4 * hidden, input_size), jnp.float32, -scale, scale),
        "w_hh":  jax.random.uniform(ks[1], (4 * hidden, hidden),     jnp.float32, -scale, scale),
        "b_ih":  jax.random.uniform(ks[2], (4 * hidden,),            jnp.float32, -scale, scale),
        "b_hh":  jax.random.uniform(ks[3], (4 * hidden,),            jnp.float32, -scale, scale),
        "w_lin": jax.random.uniform(ks[4], (1, hidden),              jnp.float32, -scale, scale),
        "b_lin": jax.random.uniform(ks[5], (1,),                     jnp.float32, -scale, scale),
    }

    x = jax.random.normal(ks[6], (batch, seq, input_size), jnp.float32)
    # torch.randn initial states in forward(), made deterministic here.
    h0 = jax.random.normal(ks[7], (batch, hidden), jnp.float32)
    c0 = jax.random.normal(ks[8], (batch, hidden), jnp.float32)

    y = rgan_discriminator_forward(x, h0, c0, params)
    y = jax.block_until_ready(y)

    y_ref = jax.block_until_ready(_reference_forward(x, h0, c0, params))
    assert y.shape == (batch, seq, 1), y.shape
    assert jnp.max(jnp.abs(y - y_ref)) < 1e-4, float(jnp.max(jnp.abs(y - y_ref)))

    print("KERNEL_OK")
</pallas_src>

<mosaic_0001>
module attributes {stable_mosaic.version = 11 : i64} {
  func.func @_lstm_head_kernel(%arg0: i32, %arg1: memref<8x4x2x32xf32, #tpu.memory_space<vmem>>, %arg2: memref<2x32xf32, #tpu.memory_space<vmem>>, %arg3: memref<2x32xf32, #tpu.memory_space<vmem>>, %arg4: memref<4x32x32xf32, #tpu.memory_space<vmem>>, %arg5: memref<1x32xf32, #tpu.memory_space<vmem>>, %arg6: memref<1xf32, #tpu.memory_space<smem>>, %arg7: memref<2x8xf32, #tpu.memory_space<vmem>>, %arg8: memref<2x32xf32, #tpu.memory_space<vmem>>, %arg9: memref<2x32xf32, #tpu.memory_space<vmem>>, %arg10: memref<8x2x32xf32, #tpu.memory_space<vmem>>) attributes {dimension_semantics = [#tpu.dimension_semantics<arbitrary>], iteration_bounds = array<i64: 1>, scalar_prefetch = 0 : i64, scratch_operands = 3 : i64, tpu.core_type = #tpu.core_type<tc>, window_params = [{transform_indices = @transform_0, window_bounds = array<i64: 8, 4, 2, 32>}, {pipeline_mode = #tpu.pipeline_mode<synchronous>, transform_indices = @transform_1, window_bounds = array<i64: 2, 32>}, {pipeline_mode = #tpu.pipeline_mode<synchronous>, transform_indices = @transform_2, window_bounds = array<i64: 2, 32>}, {pipeline_mode = #tpu.pipeline_mode<synchronous>, transform_indices = @transform_3, window_bounds = array<i64: 4, 32, 32>}, {pipeline_mode = #tpu.pipeline_mode<synchronous>, transform_indices = @transform_4, window_bounds = array<i64: 1, 32>}, {transform_indices = @transform_5, window_bounds = array<i64: 1>}, {transform_indices = @transform_6, window_bounds = array<i64: 2, 8>}]} {
    %c0_i32 = arith.constant 0 : i32
    %0 = arith.cmpi eq, %arg0, %c0_i32 : i32
    %1 = arith.extui %0 : i1 to i32
    %c0_i32_0 = arith.constant 0 : i32
    %2 = arith.cmpi ne, %1, %c0_i32_0 : i32
    scf.if %2 {
      %c0_123 = arith.constant 0 : index
      %c0_124 = arith.constant 0 : index
      %383 = vector.load %arg2[%c0_123, %c0_124] : memref<2x32xf32, #tpu.memory_space<vmem>>, vector<2x32xf32>
      %c0_125 = arith.constant 0 : index
      %c0_126 = arith.constant 0 : index
      %384 = vector.load %arg8[%c0_125, %c0_126] : memref<2x32xf32, #tpu.memory_space<vmem>>, vector<2x32xf32>
      tpu.vector_store %arg8[%c0_125, %c0_126], %383 {strides = array<i32>} : memref<2x32xf32, #tpu.memory_space<vmem>>, vector<2x32xf32>,
      %c0_127 = arith.constant 0 : index
      %c0_128 = arith.constant 0 : index
      %385 = vector.load %arg3[%c0_127, %c0_128] : memref<2x32xf32, #tpu.memory_space<vmem>>, vector<2x32xf32>
      %c0_129 = arith.constant 0 : index
      %c0_130 = arith.constant 0 : index
      %386 = vector.load %arg9[%c0_129, %c0_130] : memref<2x32xf32, #tpu.memory_space<vmem>>, vector<2x32xf32>
      tpu.vector_store %arg9[%c0_129, %c0_130], %385 {strides = array<i32>} : memref<2x32xf32, #tpu.memory_space<vmem>>, vector<2x32xf32>,
    } else {
    }
    %c0 = arith.constant 0 : index
    %c0_1 = arith.constant 0 : index
    %c0_2 = arith.constant 0 : index
    %3 = vector.load %arg4[%c0, %c0_1, %c0_2] : memref<4x32x32xf32, #tpu.memory_space<vmem>>, vector<1x32x32xf32>
    %4 = vector.shape_cast %3 : vector<1x32x32xf32> to vector<32x32xf32>
    %c1 = arith.constant 1 : index
    %c0_3 = arith.constant 0 : index
    %c0_4 = arith.constant 0 : index
    %5 = vector.load %arg4[%c1, %c0_3, %c0_4] : memref<4x32x32xf32, #tpu.memory_space<vmem>>, vector<1x32x32xf32>
    %6 = vector.shape_cast %5 : vector<1x32x32xf32> to vector<32x32xf32>
    %c2 = arith.constant 2 : index
    %c0_5 = arith.constant 0 : index
    %c0_6 = arith.constant 0 : index
    %7 = vector.load %arg4[%c2, %c0_5, %c0_6] : memref<4x32x32xf32, #tpu.memory_space<vmem>>, vector<1x32x32xf32>
    %8 = vector.shape_cast %7 : vector<1x32x32xf32> to vector<32x32xf32>
    %c3 = arith.constant 3 : index
    %c0_7 = arith.constant 0 : index
    %c0_8 = arith.constant 0 : index
    %9 = vector.load %arg4[%c3, %c0_7, %c0_8] : memref<4x32x32xf32, #tpu.memory_space<vmem>>, vector<1x32x32xf32>
    %10 = vector.shape_cast %9 : vector<1x32x32xf32> to vector<32x32xf32>
    %c0_9 = arith.constant 0 : index
    %c0_10 = arith.constant 0 : index
    %11 = vector.load %arg8[%c0_9, %c0_10] : memref<2x32xf32, #tpu.memory_space<vmem>>, vector<2x32xf32>
    %c0_11 = arith.constant 0 : index
    %c0_12 = arith.constant 0 : index
    %12 = vector.load %arg9[%c0_11, %c0_12] : memref<2x32xf32, #tpu.memory_space<vmem>>, vector<2x32xf32>
    %c0_i32_13 = arith.constant 0 : i32
    %13 = arith.index_cast %c0_i32_13 : i32 to index
    %c0_14 = arith.constant 0 : index
    %c0_15 = arith.constant 0 : index
    %c0_16 = arith.constant 0 : index
    %14 = vector.load %arg1[%13, %c0_14, %c0_15, %c0_16] : memref<8x4x2x32xf32, #tpu.memory_space<vmem>>, vector<1x4x2x32xf32>
    %15 = vector.shape_cast %14 : vector<1x4x2x32xf32> to vector<4x2x32xf32>
    %16 = vector.extract_strided_slice %15 {offsets = [0, 0, 0], sizes = [1, 2, 32], strides = [1, 1, 1]} : vector<4x2x32xf32> to vector<1x2x32xf32>
    %17 = vector.shape_cast %16 : vector<1x2x32xf32> to vector<2x32xf32>
    %cst = arith.constant dense<0.000000e+00> : vector<2x32xf32>
    %18 = tpu.matmul %11, %4, %cst {dimension_numbers = #tpu.dot_dimension_numbers<[1], [0], [0], [1], [0, 0, 1, 1], [], []>} : vector<2x32xf32>, vector<32x32xf32>, vector<2x32xf32> -> vector<2x32xf32>
    %19 = arith.addf %17, %18 : vector<2x32xf32>
    %20 = arith.negf %19 : vector<2x32xf32>
    %21 = math.exp %20 : vector<2x32xf32>
    %cst_17 = arith.constant 1.000000e+00 : f32
    %22 = vector.broadcast %cst_17 : f32 to vector<2x32xf32>
    %23 = arith.addf %22, %21 : vector<2x32xf32>
    %24 = arith.divf %22, %23 : vector<2x32xf32>
    %25 = vector.extract_strided_slice %15 {offsets = [1, 0, 0], sizes = [1, 2, 32], strides = [1, 1, 1]} : vector<4x2x32xf32> to vector<1x2x32xf32>
    %26 = vector.shape_cast %25 : vector<1x2x32xf32> to vector<2x32xf32>
    %cst_18 = arith.constant dense<0.000000e+00> : vector<2x32xf32>
    %27 = tpu.matmul %11, %6, %cst_18 {dimension_numbers = #tpu.dot_dimension_numbers<[1], [0], [0], [1], [0, 0, 1, 1], [], []>} : vector<2x32xf32>, vector<32x32xf32>, vector<2x32xf32> -> vector<2x32xf32>
    %28 = arith.addf %26, %27 : vector<2x32xf32>
    %29 = arith.negf %28 : vector<2x32xf32>
    %30 = math.exp %29 : vector<2x32xf32>
    %cst_19 = arith.constant 1.000000e+00 : f32
    %31 = vector.broadcast %cst_19 : f32 to vector<2x32xf32>
    %32 = arith.addf %31, %30 : vector<2x32xf32>
    %33 = arith.divf %31, %32 : vector<2x32xf32>
    %34 = vector.extract_strided_slice %15 {offsets = [2, 0, 0], sizes = [1, 2, 32], strides = [1, 1, 1]} : vector<4x2x32xf32> to vector<1x2x32xf32>
    %35 = vector.shape_cast %34 : vector<1x2x32xf32> to vector<2x32xf32>
    %cst_20 = arith.constant dense<0.000000e+00> : vector<2x32xf32>
    %36 = tpu.matmul %11, %8, %cst_20 {dimension_numbers = #tpu.dot_dimension_numbers<[1], [0], [0], [1], [0, 0, 1, 1], [], []>} : vector<2x32xf32>, vector<32x32xf32>, vector<2x32xf32> -> vector<2x32xf32>
    %37 = arith.addf %35, %36 : vector<2x32xf32>
    %38 = math.tanh %37 : vector<2x32xf32>
    %39 = vector.extract_strided_slice %15 {offsets = [3, 0, 0], sizes = [1, 2, 32], strides = [1, 1, 1]} : vector<4x2x32xf32> to vector<1x2x32xf32>
    %40 = vector.shape_cast %39 : vector<1x2x32xf32> to vector<2x32xf32>
    %cst_21 = arith.constant dense<0.000000e+00> : vector<2x32xf32>
    %41 = tpu.matmul %11, %10, %cst_21 {dimension_numbers = #tpu.dot_dimension_numbers<[1], [0], [0], [1], [0, 0, 1, 1], [], []>} : vector<2x32xf32>, vector<32x32xf32>, vector<2x32xf32> -> vector<2x32xf32>
    %42 = arith.addf %40, %41 : vector<2x32xf32>
    %43 = arith.negf %42 : vector<2x32xf32>
    %44 = math.exp %43 : vector<2x32xf32>
    %cst_22 = arith.constant 1.000000e+00 : f32
    %45 = vector.broadcast %cst_22 : f32 to vector<2x32xf32>
    %46 = arith.addf %45, %44 : vector<2x32xf32>
    %47 = arith.divf %45, %46 : vector<2x32xf32>
    %48 = arith.mulf %33, %12 : vector<2x32xf32>
    %49 = arith.mulf %24, %38 : vector<2x32xf32>
    %50 = arith.addf %48, %49 : vector<2x32xf32>
    %51 = math.tanh %50 : vector<2x32xf32>
    %52 = arith.mulf %47, %51 : vector<2x32xf32>
    %53 = arith.index_cast %c0_i32_13 : i32 to index
    %c0_23 = arith.constant 0 : index
    %c0_24 = arith.constant 0 : index
    %54 = vector.load %arg10[%53, %c0_23, %c0_24] : memref<8x2x32xf32, #tpu.memory_space<vmem>>, vector<1x2x32xf32>
    %55 = vector.shape_cast %54 : vector<1x2x32xf32> to vector<2x32xf32>
    %56 = vector.shape_cast %52 : vector<2x32xf32> to vector<1x2x32xf32>
    tpu.vector_store %arg10[%53, %c0_23, %c0_24], %56 {strides = array<i32>} : memref<8x2x32xf32, #tpu.memory_space<vmem>>, vector<1x2x32xf32>,
    %c1_i32 = arith.constant 1 : i32
    %57 = arith.index_cast %c1_i32 : i32 to index
    %c0_25 = arith.constant 0 : index
    %c0_26 = arith.constant 0 : index
    %c0_27 = arith.constant 0 : index
    %58 = vector.load %arg1[%57, %c0_25, %c0_26, %c0_27] : memref<8x4x2x32xf32, #tpu.memory_space<vmem>>, vector<1x4x2x32xf32>
    %59 = vector.shape_cast %58 : vector<1x4x2x32xf32> to vector<4x2x32xf32>
    %60 = vector.extract_strided_slice %59 {offsets = [0, 0, 0], sizes = [1, 2, 32], strides = [1, 1, 1]} : vector<4x2x32xf32> to vector<1x2x32xf32>
    %61 = vector.shape_cast %60 : vector<1x2x32xf32> to vector<2x32xf32>
    %cst_28 = arith.constant dense<0.000000e+00> : vector<2x32xf32>
    %62 = tpu.matmul %52, %4, %cst_28 {dimension_numbers = #tpu.dot_dimension_numbers<[1], [0], [0], [1], [0, 0, 1, 1], [], []>} : vector<2x32xf32>, vector<32x32xf32>, vector<2x32xf32> -> vector<2x32xf32>
    %63 = arith.addf %61, %62 : vector<2x32xf32>
    %64 = arith.negf %63 : vector<2x32xf32>
    %65 = math.exp %64 : vector<2x32xf32>
    %cst_29 = arith.constant 1.000000e+00 : f32
    %66 = vector.broadcast %cst_29 : f32 to vector<2x32xf32>
    %67 = arith.addf %66, %65 : vector<2x32xf32>
    %68 = arith.divf %66, %67 : vector<2x32xf32>
    %69 = vector.extract_strided_slice %59 {offsets = [1, 0, 0], sizes = [1, 2, 32], strides = [1, 1, 1]} : vector<4x2x32xf32> to vector<1x2x32xf32>
    %70 = vector.shape_cast %69 : vector<1x2x32xf32> to vector<2x32xf32>
    %cst_30 = arith.constant dense<0.000000e+00> : vector<2x32xf32>
    %71 = tpu.matmul %52, %6, %cst_30 {dimension_numbers = #tpu.dot_dimension_numbers<[1], [0], [0], [1], [0, 0, 1, 1], [], []>} : vector<2x32xf32>, vector<32x32xf32>, vector<2x32xf32> -> vector<2x32xf32>
    %72 = arith.addf %70, %71 : vector<2x32xf32>
    %73 = arith.negf %72 : vector<2x32xf32>
    %74 = math.exp %73 : vector<2x32xf32>
    %cst_31 = arith.constant 1.000000e+00 : f32
    %75 = vector.broadcast %cst_31 : f32 to vector<2x32xf32>
    %76 = arith.addf %75, %74 : vector<2x32xf32>
    %77 = arith.divf %75, %76 : vector<2x32xf32>
    %78 = vector.extract_strided_slice %59 {offsets = [2, 0, 0], sizes = [1, 2, 32], strides = [1, 1, 1]} : vector<4x2x32xf32> to vector<1x2x32xf32>
    %79 = vector.shape_cast %78 : vector<1x2x32xf32> to vector<2x32xf32>
    %cst_32 = arith.constant dense<0.000000e+00> : vector<2x32xf32>
    %80 = tpu.matmul %52, %8, %cst_32 {dimension_numbers = #tpu.dot_dimension_numbers<[1], [0], [0], [1], [0, 0, 1, 1], [], []>} : vector<2x32xf32>, vector<32x32xf32>, vector<2x32xf32> -> vector<2x32xf32>
    %81 = arith.addf %79, %80 : vector<2x32xf32>
    %82 = math.tanh %81 : vector<2x32xf32>
    %83 = vector.extract_strided_slice %59 {offsets = [3, 0, 0], sizes = [1, 2, 32], strides = [1, 1, 1]} : vector<4x2x32xf32> to vector<1x2x32xf32>
    %84 = vector.shape_cast %83 : vector<1x2x32xf32> to vector<2x32xf32>
    %cst_33 = arith.constant dense<0.000000e+00> : vector<2x32xf32>
    %85 = tpu.matmul %52, %10, %cst_33 {dimension_numbers = #tpu.dot_dimension_numbers<[1], [0], [0], [1], [0, 0, 1, 1], [], []>} : vector<2x32xf32>, vector<32x32xf32>, vector<2x32xf32> -> vector<2x32xf32>
    %86 = arith.addf %84, %85 : vector<2x32xf32>
    %87 = arith.negf %86 : vector<2x32xf32>
    %88 = math.exp %87 : vector<2x32xf32>
    %cst_34 = arith.constant 1.000000e+00 : f32
    %89 = vector.broadcast %cst_34 : f32 to vector<2x32xf32>
    %90 = arith.addf %89, %88 : vector<2x32xf32>
    %91 = arith.divf %89, %90 : vector<2x32xf32>
    %92 = arith.mulf %77, %50 : vector<2x32xf32>
    %93 = arith.mulf %68, %82 : vector<2x32xf32>
    %94 = arith.addf %92, %93 : vector<2x32xf32>
    %95 = math.tanh %94 : vector<2x32xf32>
    %96 = arith.mulf %91, %95 : vector<2x32xf32>
    %97 = arith.index_cast %c1_i32 : i32 to index
    %c0_35 = arith.constant 0 : index
    %c0_36 = arith.constant 0 : index
    %98 = vector.load %arg10[%97, %c0_35, %c0_36] : memref<8x2x32xf32, #tpu.memory_space<vmem>>, vector<1x2x32xf32>
    %99 = vector.shape_cast %98 : vector<1x2x32xf32> to vector<2x32xf32>
    %100 = vector.shape_cast %96 : vector<2x32xf32> to vector<1x2x32xf32>
    tpu.vector_store %arg10[%97, %c0_35, %c0_36], %100 {strides = array<i32>} : memref<8x2x32xf32, #tpu.memory_space<vmem>>, vector<1x2x32xf32>,
    %c2_i32 = arith.constant 2 : i32
    %101 = arith.index_cast %c2_i32 : i32 to index
    %c0_37 = arith.constant 0 : index
    %c0_38 = arith.constant 0 : index
    %c0_39 = arith.constant 0 : index
    %102 = vector.load %arg1[%101, %c0_37, %c0_38, %c0_39] : memref<8x4x2x32xf32, #tpu.memory_space<vmem>>, vector<1x4x2x32xf32>
    %103 = vector.shape_cast %102 : vector<1x4x2x32xf32> to vector<4x2x32xf32>
    %104 = vector.extract_strided_slice %103 {offsets = [0, 0, 0], sizes = [1, 2, 32], strides = [1, 1, 1]} : vector<4x2x32xf32> to vector<1x2x32xf32>
    %105 = vector.shape_cast %104 : vector<1x2x32xf32> to vector<2x32xf32>
    %cst_40 = arith.constant dense<0.000000e+00> : vector<2x32xf32>
    %106 = tpu.matmul %96, %4, %cst_40 {dimension_numbers = #tpu.dot_dimension_numbers<[1], [0], [0], [1], [0, 0, 1, 1], [], []>} : vector<2x32xf32>, vector<32x32xf32>, vector<2x32xf32> -> vector<2x32xf32>
    %107 = arith.addf %105, %106 : vector<2x32xf32>
    %108 = arith.negf %107 : vector<2x32xf32>
    %109 = math.exp %108 : vector<2x32xf32>
    %cst_41 = arith.constant 1.000000e+00 : f32
    %110 = vector.broadcast %cst_41 : f32 to vector<2x32xf32>
    %111 = arith.addf %110, %109 : vector<2x32xf32>
    %112 = arith.divf %110, %111 : vector<2x32xf32>
    %113 = vector.extract_strided_slice %103 {offsets = [1, 0, 0], sizes = [1, 2, 32], strides = [1, 1, 1]} : vector<4x2x32xf32> to vector<1x2x32xf32>
    %114 = vector.shape_cast %113 : vector<1x2x32xf32> to vector<2x32xf32>
    %cst_42 = arith.constant dense<0.000000e+00> : vector<2x32xf32>
    %115 = tpu.matmul %96, %6, %cst_42 {dimension_numbers = #tpu.dot_dimension_numbers<[1], [0], [0], [1], [0, 0, 1, 1], [], []>} : vector<2x32xf32>, vector<32x32xf32>, vector<2x32xf32> -> vector<2x32xf32>
    %116 = arith.addf %114, %115 : vector<2x32xf32>
    %117 = arith.negf %116 : vector<2x32xf32>
    %118 = math.exp %117 : vector<2x32xf32>
    %cst_43 = arith.constant 1.000000e+00 : f32
    %119 = vector.broadcast %cst_43 : f32 to vector<2x32xf32>
    %120 = arith.addf %119, %118 : vector<2x32xf32>
    %121 = arith.divf %119, %120 : vector<2x32xf32>
    %122 = vector.extract_strided_slice %103 {offsets = [2, 0, 0], sizes = [1, 2, 32], strides = [1, 1, 1]} : vector<4x2x32xf32> to vector<1x2x32xf32>
    %123 = vector.shape_cast %122 : vector<1x2x32xf32> to vector<2x32xf32>
    %cst_44 = arith.constant dense<0.000000e+00> : vector<2x32xf32>
    %124 = tpu.matmul %96, %8, %cst_44 {dimension_numbers = #tpu.dot_dimension_numbers<[1], [0], [0], [1], [0, 0, 1, 1], [], []>} : vector<2x32xf32>, vector<32x32xf32>, vector<2x32xf32> -> vector<2x32xf32>
    %125 = arith.addf %123, %124 : vector<2x32xf32>
    %126 = math.tanh %125 : vector<2x32xf32>
    %127 = vector.extract_strided_slice %103 {offsets = [3, 0, 0], sizes = [1, 2, 32], strides = [1, 1, 1]} : vector<4x2x32xf32> to vector<1x2x32xf32>
    %128 = vector.shape_cast %127 : vector<1x2x32xf32> to vector<2x32xf32>
    %cst_45 = arith.constant dense<0.000000e+00> : vector<2x32xf32>
    %129 = tpu.matmul %96, %10, %cst_45 {dimension_numbers = #tpu.dot_dimension_numbers<[1], [0], [0], [1], [0, 0, 1, 1], [], []>} : vector<2x32xf32>, vector<32x32xf32>, vector<2x32xf32> -> vector<2x32xf32>
    %130 = arith.addf %128, %129 : vector<2x32xf32>
    %131 = arith.negf %130 : vector<2x32xf32>
    %132 = math.exp %131 : vector<2x32xf32>
    %cst_46 = arith.constant 1.000000e+00 : f32
    %133 = vector.broadcast %cst_46 : f32 to vector<2x32xf32>
    %134 = arith.addf %133, %132 : vector<2x32xf32>
    %135 = arith.divf %133, %134 : vector<2x32xf32>
    %136 = arith.mulf %121, %94 : vector<2x32xf32>
    %137 = arith.mulf %112, %126 : vector<2x32xf32>
    %138 = arith.addf %136, %137 : vector<2x32xf32>
    %139 = math.tanh %138 : vector<2x32xf32>
    %140 = arith.mulf %135, %139 : vector<2x32xf32>
    %141 = arith.index_cast %c2_i32 : i32 to index
    %c0_47 = arith.constant 0 : index
    %c0_48 = arith.constant 0 : index
    %142 = vector.load %arg10[%141, %c0_47, %c0_48] : memref<8x2x32xf32, #tpu.memory_space<vmem>>, vector<1x2x32xf32>
    %143 = vector.shape_cast %142 : vector<1x2x32xf32> to vector<2x32xf32>
    %144 = vector.shape_cast %140 : vector<2x32xf32> to vector<1x2x32xf32>
    tpu.vector_store %arg10[%141, %c0_47, %c0_48], %144 {strides = array<i32>} : memref<8x2x32xf32, #tpu.memory_space<vmem>>, vector<1x2x32xf32>,
    %c3_i32 = arith.constant 3 : i32
    %145 = arith.index_cast %c3_i32 : i32 to index
    %c0_49 = arith.constant 0 : index
    %c0_50 = arith.constant 0 : index
    %c0_51 = arith.constant 0 : index
    %146 = vector.load %arg1[%145, %c0_49, %c0_50, %c0_51] : memref<8x4x2x32xf32, #tpu.memory_space<vmem>>, vector<1x4x2x32xf32>
    %147 = vector.shape_cast %146 : vector<1x4x2x32xf32> to vector<4x2x32xf32>
    %148 = vector.extract_strided_slice %147 {offsets = [0, 0, 0], sizes = [1, 2, 32], strides = [1, 1, 1]} : vector<4x2x32xf32> to vector<1x2x32xf32>
    %149 = vector.shape_cast %148 : vector<1x2x32xf32> to vector<2x32xf32>
    %cst_52 = arith.constant dense<0.000000e+00> : vector<2x32xf32>
    %150 = tpu.matmul %140, %4, %cst_52 {dimension_numbers = #tpu.dot_dimension_numbers<[1], [0], [0], [1], [0, 0, 1, 1], [], []>} : vector<2x32xf32>, vector<32x32xf32>, vector<2x32xf32> -> vector<2x32xf32>
    %151 = arith.addf %149, %150 : vector<2x32xf32>
    %152 = arith.negf %151 : vector<2x32xf32>
    %153 = math.exp %152 : vector<2x32xf32>
    %cst_53 = arith.constant 1.000000e+00 : f32
    %154 = vector.broadcast %cst_53 : f32 to vector<2x32xf32>
    %155 = arith.addf %154, %153 : vector<2x32xf32>
    %156 = arith.divf %154, %155 : vector<2x32xf32>
    %157 = vector.extract_strided_slice %147 {offsets = [1, 0, 0], sizes = [1, 2, 32], strides = [1, 1, 1]} : vector<4x2x32xf32> to vector<1x2x32xf32>
    %158 = vector.shape_cast %157 : vector<1x2x32xf32> to vector<2x32xf32>
    %cst_54 = arith.constant dense<0.000000e+00> : vector<2x32xf32>
    %159 = tpu.matmul %140, %6, %cst_54 {dimension_numbers = #tpu.dot_dimension_numbers<[1], [0], [0], [1], [0, 0, 1, 1], [], []>} : vector<2x32xf32>, vector<32x32xf32>, vector<2x32xf32> -> vector<2x32xf32>
    %160 = arith.addf %158, %159 : vector<2x32xf32>
    %161 = arith.negf %160 : vector<2x32xf32>
    %162 = math.exp %161 : vector<2x32xf32>
    %cst_55 = arith.constant 1.000000e+00 : f32
    %163 = vector.broadcast %cst_55 : f32 to vector<2x32xf32>
    %164 = arith.addf %163, %162 : vector<2x32xf32>
    %165 = arith.divf %163, %164 : vector<2x32xf32>
    %166 = vector.extract_strided_slice %147 {offsets = [2, 0, 0], sizes = [1, 2, 32], strides = [1, 1, 1]} : vector<4x2x32xf32> to vector<1x2x32xf32>
    %167 = vector.shape_cast %166 : vector<1x2x32xf32> to vector<2x32xf32>
    %cst_56 = arith.constant dense<0.000000e+00> : vector<2x32xf32>
    %168 = tpu.matmul %140, %8, %cst_56 {dimension_numbers = #tpu.dot_dimension_numbers<[1], [0], [0], [1], [0, 0, 1, 1], [], []>} : vector<2x32xf32>, vector<32x32xf32>, vector<2x32xf32> -> vector<2x32xf32>
    %169 = arith.addf %167, %168 : vector<2x32xf32>
    %170 = math.tanh %169 : vector<2x32xf32>
    %171 = vector.extract_strided_slice %147 {offsets = [3, 0, 0], sizes = [1, 2, 32], strides = [1, 1, 1]} : vector<4x2x32xf32> to vector<1x2x32xf32>
    %172 = vector.shape_cast %171 : vector<1x2x32xf32> to vector<2x32xf32>
    %cst_57 = arith.constant dense<0.000000e+00> : vector<2x32xf32>
    %173 = tpu.matmul %140, %10, %cst_57 {dimension_numbers = #tpu.dot_dimension_numbers<[1], [0], [0], [1], [0, 0, 1, 1], [], []>} : vector<2x32xf32>, vector<32x32xf32>, vector<2x32xf32> -> vector<2x32xf32>
    %174 = arith.addf %172, %173 : vector<2x32xf32>
    %175 = arith.negf %174 : vector<2x32xf32>
    %176 = math.exp %175 : vector<2x32xf32>
    %cst_58 = arith.constant 1.000000e+00 : f32
    %177 = vector.broadcast %cst_58 : f32 to vector<2x32xf32>
    %178 = arith.addf %177, %176 : vector<2x32xf32>
    %179 = arith.divf %177, %178 : vector<2x32xf32>
    %180 = arith.mulf %165, %138 : vector<2x32xf32>
    %181 = arith.mulf %156, %170 : vector<2x32xf32>
    %182 = arith.addf %180, %181 : vector<2x32xf32>
    %183 = math.tanh %182 : vector<2x32xf32>
    %184 = arith.mulf %179, %183 : vector<2x32xf32>
    %185 = arith.index_cast %c3_i32 : i32 to index
    %c0_59 = arith.constant 0 : index
    %c0_60 = arith.constant 0 : index
    %186 = vector.load %arg10[%185, %c0_59, %c0_60] : memref<8x2x32xf32, #tpu.memory_space<vmem>>, vector<1x2x32xf32>
    %187 = vector.shape_cast %186 : vector<1x2x32xf32> to vector<2x32xf32>
    %188 = vector.shape_cast %184 : vector<2x32xf32> to vector<1x2x32xf32>
    tpu.vector_store %arg10[%185, %c0_59, %c0_60], %188 {strides = array<i32>} : memref<8x2x32xf32, #tpu.memory_space<vmem>>, vector<1x2x32xf32>,
    %c4_i32 = arith.constant 4 : i32
    %189 = arith.index_cast %c4_i32 : i32 to index
    %c0_61 = arith.constant 0 : index
    %c0_62 = arith.constant 0 : index
    %c0_63 = arith.constant 0 : index
    %190 = vector.load %arg1[%189, %c0_61, %c0_62, %c0_63] : memref<8x4x2x32xf32, #tpu.memory_space<vmem>>, vector<1x4x2x32xf32>
    %191 = vector.shape_cast %190 : vector<1x4x2x32xf32> to vector<4x2x32xf32>
    %192 = vector.extract_strided_slice %191 {offsets = [0, 0, 0], sizes = [1, 2, 32], strides = [1, 1, 1]} : vector<4x2x32xf32> to vector<1x2x32xf32>
    %193 = vector.shape_cast %192 : vector<1x2x32xf32> to vector<2x32xf32>
    %cst_64 = arith.constant dense<0.000000e+00> : vector<2x32xf32>
    %194 = tpu.matmul %184, %4, %cst_64 {dimension_numbers = #tpu.dot_dimension_numbers<[1], [0], [0], [1], [0, 0, 1, 1], [], []>} : vector<2x32xf32>, vector<32x32xf32>, vector<2x32xf32> -> vector<2x32xf32>
    %195 = arith.addf %193, %194 : vector<2x32xf32>
    %196 = arith.negf %195 : vector<2x32xf32>
    %197 = math.exp %196 : vector<2x32xf32>
    %cst_65 = arith.constant 1.000000e+00 : f32
    %198 = vector.broadcast %cst_65 : f32 to vector<2x32xf32>
    %199 = arith.addf %198, %197 : vector<2x32xf32>
    %200 = arith.divf %198, %199 : vector<2x32xf32>
    %201 = vector.extract_strided_slice %191 {offsets = [1, 0, 0], sizes = [1, 2, 32], strides = [1, 1, 1]} : vector<4x2x32xf32> to vector<1x2x32xf32>
    %202 = vector.shape_cast %201 : vector<1x2x32xf32> to vector<2x32xf32>
    %cst_66 = arith.constant dense<0.000000e+00> : vector<2x32xf32>
    %203 = tpu.matmul %184, %6, %cst_66 {dimension_numbers = #tpu.dot_dimension_numbers<[1], [0], [0], [1], [0, 0, 1, 1], [], []>} : vector<2x32xf32>, vector<32x32xf32>, vector<2x32xf32> -> vector<2x32xf32>
    %204 = arith.addf %202, %203 : vector<2x32xf32>
    %205 = arith.negf %204 : vector<2x32xf32>
    %206 = math.exp %205 : vector<2x32xf32>
    %cst_67 = arith.constant 1.000000e+00 : f32
    %207 = vector.broadcast %cst_67 : f32 to vector<2x32xf32>
    %208 = arith.addf %207, %206 : vector<2x32xf32>
    %209 = arith.divf %207, %208 : vector<2x32xf32>
    %210 = vector.extract_strided_slice %191 {offsets = [2, 0, 0], sizes = [1, 2, 32], strides = [1, 1, 1]} : vector<4x2x32xf32> to vector<1x2x32xf32>
    %211 = vector.shape_cast %210 : vector<1x2x32xf32> to vector<2x32xf32>
    %cst_68 = arith.constant dense<0.000000e+00> : vector<2x32xf32>
    %212 = tpu.matmul %184, %8, %cst_68 {dimension_numbers = #tpu.dot_dimension_numbers<[1], [0], [0], [1], [0, 0, 1, 1], [], []>} : vector<2x32xf32>, vector<32x32xf32>, vector<2x32xf32> -> vector<2x32xf32>
    %213 = arith.addf %211, %212 : vector<2x32xf32>
    %214 = math.tanh %213 : vector<2x32xf32>
    %215 = vector.extract_strided_slice %191 {offsets = [3, 0, 0], sizes = [1, 2, 32], strides = [1, 1, 1]} : vector<4x2x32xf32> to vector<1x2x32xf32>
    %216 = vector.shape_cast %215 : vector<1x2x32xf32> to vector<2x32xf32>
    %cst_69 = arith.constant dense<0.000000e+00> : vector<2x32xf32>
    %217 = tpu.matmul %184, %10, %cst_69 {dimension_numbers = #tpu.dot_dimension_numbers<[1], [0], [0], [1], [0, 0, 1, 1], [], []>} : vector<2x32xf32>, vector<32x32xf32>, vector<2x32xf32> -> vector<2x32xf32>
    %218 = arith.addf %216, %217 : vector<2x32xf32>
    %219 = arith.negf %218 : vector<2x32xf32>
    %220 = math.exp %219 : vector<2x32xf32>
    %cst_70 = arith.constant 1.000000e+00 : f32
    %221 = vector.broadcast %cst_70 : f32 to vector<2x32xf32>
    %222 = arith.addf %221, %220 : vector<2x32xf32>
    %223 = arith.divf %221, %222 : vector<2x32xf32>
    %224 = arith.mulf %209, %182 : vector<2x32xf32>
    %225 = arith.mulf %200, %214 : vector<2x32xf32>
    %226 = arith.addf %224, %225 : vector<2x32xf32>
    %227 = math.tanh %226 : vector<2x32xf32>
    %228 = arith.mulf %223, %227 : vector<2x32xf32>
    %229 = arith.index_cast %c4_i32 : i32 to index
    %c0_71 = arith.constant 0 : index
    %c0_72 = arith.constant 0 : index
    %230 = vector.load %arg10[%229, %c0_71, %c0_72] : memref<8x2x32xf32, #tpu.memory_space<vmem>>, vector<1x2x32xf32>
    %231 = vector.shape_cast %230 : vector<1x2x32xf32> to vector<2x32xf32>
    %232 = vector.shape_cast %228 : vector<2x32xf32> to vector<1x2x32xf32>
    tpu.vector_store %arg10[%229, %c0_71, %c0_72], %232 {strides = array<i32>} : memref<8x2x32xf32, #tpu.memory_space<vmem>>, vector<1x2x32xf32>,
    %c5_i32 = arith.constant 5 : i32
    %233 = arith.index_cast %c5_i32 : i32 to index
    %c0_73 = arith.constant 0 : index
    %c0_74 = arith.constant 0 : index
    %c0_75 = arith.constant 0 : index
    %234 = vector.load %arg1[%233, %c0_73, %c0_74, %c0_75] : memref<8x4x2x32xf32, #tpu.memory_space<vmem>>, vector<1x4x2x32xf32>
    %235 = vector.shape_cast %234 : vector<1x4x2x32xf32> to vector<4x2x32xf32>
    %236 = vector.extract_strided_slice %235 {offsets = [0, 0, 0], sizes = [1, 2, 32], strides = [1, 1, 1]} : vector<4x2x32xf32> to vector<1x2x32xf32>
    %237 = vector.shape_cast %236 : vector<1x2x32xf32> to vector<2x32xf32>
    %cst_76 = arith.constant dense<0.000000e+00> : vector<2x32xf32>
    %238 = tpu.matmul %228, %4, %cst_76 {dimension_numbers = #tpu.dot_dimension_numbers<[1], [0], [0], [1], [0, 0, 1, 1], [], []>} : vector<2x32xf32>, vector<32x32xf32>, vector<2x32xf32> -> vector<2x32xf32>
    %239 = arith.addf %237, %238 : vector<2x32xf32>
    %240 = arith.negf %239 : vector<2x32xf32>
    %241 = math.exp %240 : vector<2x32xf32>
    %cst_77 = arith.constant 1.000000e+00 : f32
    %242 = vector.broadcast %cst_77 : f32 to vector<2x32xf32>
    %243 = arith.addf %242, %241 : vector<2x32xf32>
    %244 = arith.divf %242, %243 : vector<2x32xf32>
    %245 = vector.extract_strided_slice %235 {offsets = [1, 0, 0], sizes = [1, 2, 32], strides = [1, 1, 1]} : vector<4x2x32xf32> to vector<1x2x32xf32>
    %246 = vector.shape_cast %245 : vector<1x2x32xf32> to vector<2x32xf32>
    %cst_78 = arith.constant dense<0.000000e+00> : vector<2x32xf32>
    %247 = tpu.matmul %228, %6, %cst_78 {dimension_numbers = #tpu.dot_dimension_numbers<[1], [0], [0], [1], [0, 0, 1, 1], [], []>} : vector<2x32xf32>, vector<32x32xf32>, vector<2x32xf32> -> vector<2x32xf32>
    %248 = arith.addf %246, %247 : vector<2x32xf32>
    %249 = arith.negf %248 : vector<2x32xf32>
    %250 = math.exp %249 : vector<2x32xf32>
    %cst_79 = arith.constant 1.000000e+00 : f32
    %251 = vector.broadcast %cst_79 : f32 to vector<2x32xf32>
    %252 = arith.addf %251, %250 : vector<2x32xf32>
    %253 = arith.divf %251, %252 : vector<2x32xf32>
    %254 = vector.extract_strided_slice %235 {offsets = [2, 0, 0], sizes = [1, 2, 32], strides = [1, 1, 1]} : vector<4x2x32xf32> to vector<1x2x32xf32>
    %255 = vector.shape_cast %254 : vector<1x2x32xf32> to vector<2x32xf32>
    %cst_80 = arith.constant dense<0.000000e+00> : vector<2x32xf32>
    %256 = tpu.matmul %228, %8, %cst_80 {dimension_numbers = #tpu.dot_dimension_numbers<[1], [0], [0], [1], [0, 0, 1, 1], [], []>} : vector<2x32xf32>, vector<32x32xf32>, vector<2x32xf32> -> vector<2x32xf32>
    %257 = arith.addf %255, %256 : vector<2x32xf32>
    %258 = math.tanh %257 : vector<2x32xf32>
    %259 = vector.extract_strided_slice %235 {offsets = [3, 0, 0], sizes = [1, 2, 32], strides = [1, 1, 1]} : vector<4x2x32xf32> to vector<1x2x32xf32>
    %260 = vector.shape_cast %259 : vector<1x2x32xf32> to vector<2x32xf32>
    %cst_81 = arith.constant dense<0.000000e+00> : vector<2x32xf32>
    %261 = tpu.matmul %228, %10, %cst_81 {dimension_numbers = #tpu.dot_dimension_numbers<[1], [0], [0], [1], [0, 0, 1, 1], [], []>} : vector<2x32xf32>, vector<32x32xf32>, vector<2x32xf32> -> vector<2x32xf32>
    %262 = arith.addf %260, %261 : vector<2x32xf32>
    %263 = arith.negf %262 : vector<2x32xf32>
    %264 = math.exp %263 : vector<2x32xf32>
    %cst_82 = arith.constant 1.000000e+00 : f32
    %265 = vector.broadcast %cst_82 : f32 to vector<2x32xf32>
    %266 = arith.addf %265, %264 : vector<2x32xf32>
    %267 = arith.divf %265, %266 : vector<2x32xf32>
    %268 = arith.mulf %253, %226 : vector<2x32xf32>
    %269 = arith.mulf %244, %258 : vector<2x32xf32>
    %270 = arith.addf %268, %269 : vector<2x32xf32>
    %271 = math.tanh %270 : vector<2x32xf32>
    %272 = arith.mulf %267, %271 : vector<2x32xf32>
    %273 = arith.index_cast %c5_i32 : i32 to index
    %c0_83 = arith.constant 0 : index
    %c0_84 = arith.constant 0 : index
    %274 = vector.load %arg10[%273, %c0_83, %c0_84] : memref<8x2x32xf32, #tpu.memory_space<vmem>>, vector<1x2x32xf32>
    %275 = vector.shape_cast %274 : vector<1x2x32xf32> to vector<2x32xf32>
    %276 = vector.shape_cast %272 : vector<2x32xf32> to vector<1x2x32xf32>
    tpu.vector_store %arg10[%273, %c0_83, %c0_84], %276 {strides = array<i32>} : memref<8x2x32xf32, #tpu.memory_space<vmem>>, vector<1x2x32xf32>,
    %c6_i32 = arith.constant 6 : i32
    %277 = arith.index_cast %c6_i32 : i32 to index
    %c0_85 = arith.constant 0 : index
    %c0_86 = arith.constant 0 : index
    %c0_87 = arith.constant 0 : index
    %278 = vector.load %arg1[%277, %c0_85, %c0_86, %c0_87] : memref<8x4x2x32xf32, #tpu.memory_space<vmem>>, vector<1x4x2x32xf32>
    %279 = vector.shape_cast %278 : vector<1x4x2x32xf32> to vector<4x2x32xf32>
    %280 = vector.extract_strided_slice %279 {offsets = [0, 0, 0], sizes = [1, 2, 32], strides = [1, 1, 1]} : vector<4x2x32xf32> to vector<1x2x32xf32>
    %281 = vector.shape_cast %280 : vector<1x2x32xf32> to vector<2x32xf32>
    %cst_88 = arith.constant dense<0.000000e+00> : vector<2x32xf32>
    %282 = tpu.matmul %272, %4, %cst_88 {dimension_numbers = #tpu.dot_dimension_numbers<[1], [0], [0], [1], [0, 0, 1, 1], [], []>} : vector<2x32xf32>, vector<32x32xf32>, vector<2x32xf32> -> vector<2x32xf32>
    %283 = arith.addf %281, %282 : vector<2x32xf32>
    %284 = arith.negf %283 : vector<2x32xf32>
    %285 = math.exp %284 : vector<2x32xf32>
    %cst_89 = arith.constant 1.000000e+00 : f32
    %286 = vector.broadcast %cst_89 : f32 to vector<2x32xf32>
    %287 = arith.addf %286, %285 : vector<2x32xf32>
    %288 = arith.divf %286, %287 : vector<2x32xf32>
    %289 = vector.extract_strided_slice %279 {offsets = [1, 0, 0], sizes = [1, 2, 32], strides = [1, 1, 1]} : vector<4x2x32xf32> to vector<1x2x32xf32>
    %290 = vector.shape_cast %289 : vector<1x2x32xf32> to vector<2x32xf32>
    %cst_90 = arith.constant dense<0.000000e+00> : vector<2x32xf32>
    %291 = tpu.matmul %272, %6, %cst_90 {dimension_numbers = #tpu.dot_dimension_numbers<[1], [0], [0], [1], [0, 0, 1, 1], [], []>} : vector<2x32xf32>, vector<32x32xf32>, vector<2x32xf32> -> vector<2x32xf32>
    %292 = arith.addf %290, %291 : vector<2x32xf32>
    %293 = arith.negf %292 : vector<2x32xf32>
    %294 = math.exp %293 : vector<2x32xf32>
    %cst_91 = arith.constant 1.000000e+00 : f32
    %295 = vector.broadcast %cst_91 : f32 to vector<2x32xf32>
    %296 = arith.addf %295, %294 : vector<2x32xf32>
    %297 = arith.divf %295, %296 : vector<2x32xf32>
    %298 = vector.extract_strided_slice %279 {offsets = [2, 0, 0], sizes = [1, 2, 32], strides = [1, 1, 1]} : vector<4x2x32xf32> to vector<1x2x32xf32>
    %299 = vector.shape_cast %298 : vector<1x2x32xf32> to vector<2x32xf32>
    %cst_92 = arith.constant dense<0.000000e+00> : vector<2x32xf32>
    %300 = tpu.matmul %272, %8, %cst_92 {dimension_numbers = #tpu.dot_dimension_numbers<[1], [0], [0], [1], [0, 0, 1, 1], [], []>} : vector<2x32xf32>, vector<32x32xf32>, vector<2x32xf32> -> vector<2x32xf32>
    %301 = arith.addf %299, %300 : vector<2x32xf32>
    %302 = math.tanh %301 : vector<2x32xf32>
    %303 = vector.extract_strided_slice %279 {offsets = [3, 0, 0], sizes = [1, 2, 32], strides = [1, 1, 1]} : vector<4x2x32xf32> to vector<1x2x32xf32>
    %304 = vector.shape_cast %303 : vector<1x2x32xf32> to vector<2x32xf32>
    %cst_93 = arith.constant dense<0.000000e+00> : vector<2x32xf32>
    %305 = tpu.matmul %272, %10, %cst_93 {dimension_numbers = #tpu.dot_dimension_numbers<[1], [0], [0], [1], [0, 0, 1, 1], [], []>} : vector<2x32xf32>, vector<32x32xf32>, vector<2x32xf32> -> vector<2x32xf32>
    %306 = arith.addf %304, %305 : vector<2x32xf32>
    %307 = arith.negf %306 : vector<2x32xf32>
    %308 = math.exp %307 : vector<2x32xf32>
    %cst_94 = arith.constant 1.000000e+00 : f32
    %309 = vector.broadcast %cst_94 : f32 to vector<2x32xf32>
    %310 = arith.addf %309, %308 : vector<2x32xf32>
    %311 = arith.divf %309, %310 : vector<2x32xf32>
    %312 = arith.mulf %297, %270 : vector<2x32xf32>
    %313 = arith.mulf %288, %302 : vector<2x32xf32>
    %314 = arith.addf %312, %313 : vector<2x32xf32>
    %315 = math.tanh %314 : vector<2x32xf32>
    %316 = arith.mulf %311, %315 : vector<2x32xf32>
    %317 = arith.index_cast %c6_i32 : i32 to index
    %c0_95 = arith.constant 0 : index
    %c0_96 = arith.constant 0 : index
    %318 = vector.load %arg10[%317, %c0_95, %c0_96] : memref<8x2x32xf32, #tpu.memory_space<vmem>>, vector<1x2x32xf32>
    %319 = vector.shape_cast %318 : vector<1x2x32xf32> to vector<2x32xf32>
    %320 = vector.shape_cast %316 : vector<2x32xf32> to vector<1x2x32xf32>
    tpu.vector_store %arg10[%317, %c0_95, %c0_96], %320 {strides = array<i32>} : memref<8x2x32xf32, #tpu.memory_space<vmem>>, vector<1x2x32xf32>,
    %c7_i32 = arith.constant 7 : i32
    %321 = arith.index_cast %c7_i32 : i32 to index
    %c0_97 = arith.constant 0 : index
    %c0_98 = arith.constant 0 : index
    %c0_99 = arith.constant 0 : index
    %322 = vector.load %arg1[%321, %c0_97, %c0_98, %c0_99] : memref<8x4x2x32xf32, #tpu.memory_space<vmem>>, vector<1x4x2x32xf32>
    %323 = vector.shape_cast %322 : vector<1x4x2x32xf32> to vector<4x2x32xf32>
    %324 = vector.extract_strided_slice %323 {offsets = [0, 0, 0], sizes = [1, 2, 32], strides = [1, 1, 1]} : vector<4x2x32xf32> to vector<1x2x32xf32>
    %325 = vector.shape_cast %324 : vector<1x2x32xf32> to vector<2x32xf32>
    %cst_100 = arith.constant dense<0.000000e+00> : vector<2x32xf32>
    %326 = tpu.matmul %316, %4, %cst_100 {dimension_numbers = #tpu.dot_dimension_numbers<[1], [0], [0], [1], [0, 0, 1, 1], [], []>} : vector<2x32xf32>, vector<32x32xf32>, vector<2x32xf32> -> vector<2x32xf32>
    %327 = arith.addf %325, %326 : vector<2x32xf32>
    %328 = arith.negf %327 : vector<2x32xf32>
    %329 = math.exp %328 : vector<2x32xf32>
    %cst_101 = arith.constant 1.000000e+00 : f32
    %330 = vector.broadcast %cst_101 : f32 to vector<2x32xf32>
    %331 = arith.addf %330, %329 : vector<2x32xf32>
    %332 = arith.divf %330, %331 : vector<2x32xf32>
    %333 = vector.extract_strided_slice %323 {offsets = [1, 0, 0], sizes = [1, 2, 32], strides = [1, 1, 1]} : vector<4x2x32xf32> to vector<1x2x32xf32>
    %334 = vector.shape_cast %333 : vector<1x2x32xf32> to vector<2x32xf32>
    %cst_102 = arith.constant dense<0.000000e+00> : vector<2x32xf32>
    %335 = tpu.matmul %316, %6, %cst_102 {dimension_numbers = #tpu.dot_dimension_numbers<[1], [0], [0], [1], [0, 0, 1, 1], [], []>} : vector<2x32xf32>, vector<32x32xf32>, vector<2x32xf32> -> vector<2x32xf32>
    %336 = arith.addf %334, %335 : vector<2x32xf32>
    %337 = arith.negf %336 : vector<2x32xf32>
    %338 = math.exp %337 : vector<2x32xf32>
    %cst_103 = arith.constant 1.000000e+00 : f32
    %339 = vector.broadcast %cst_103 : f32 to vector<2x32xf32>
    %340 = arith.addf %339, %338 : vector<2x32xf32>
    %341 = arith.divf %339, %340 : vector<2x32xf32>
    %342 = vector.extract_strided_slice %323 {offsets = [2, 0, 0], sizes = [1, 2, 32], strides = [1, 1, 1]} : vector<4x2x32xf32> to vector<1x2x32xf32>
    %343 = vector.shape_cast %342 : vector<1x2x32xf32> to vector<2x32xf32>
    %cst_104 = arith.constant dense<0.000000e+00> : vector<2x32xf32>
    %344 = tpu.matmul %316, %8, %cst_104 {dimension_numbers = #tpu.dot_dimension_numbers<[1], [0], [0], [1], [0, 0, 1, 1], [], []>} : vector<2x32xf32>, vector<32x32xf32>, vector<2x32xf32> -> vector<2x32xf32>
    %345 = arith.addf %343, %344 : vector<2x32xf32>
    %346 = math.tanh %345 : vector<2x32xf32>
    %347 = vector.extract_strided_slice %323 {offsets = [3, 0, 0], sizes = [1, 2, 32], strides = [1, 1, 1]} : vector<4x2x32xf32> to vector<1x2x32xf32>
    %348 = vector.shape_cast %347 : vector<1x2x32xf32> to vector<2x32xf32>
    %cst_105 = arith.constant dense<0.000000e+00> : vector<2x32xf32>
    %349 = tpu.matmul %316, %10, %cst_105 {dimension_numbers = #tpu.dot_dimension_numbers<[1], [0], [0], [1], [0, 0, 1, 1], [], []>} : vector<2x32xf32>, vector<32x32xf32>, vector<2x32xf32> -> vector<2x32xf32>
    %350 = arith.addf %348, %349 : vector<2x32xf32>
    %351 = arith.negf %350 : vector<2x32xf32>
    %352 = math.exp %351 : vector<2x32xf32>
    %cst_106 = arith.constant 1.000000e+00 : f32
    %353 = vector.broadcast %cst_106 : f32 to vector<2x32xf32>
    %354 = arith.addf %353, %352 : vector<2x32xf32>
    %355 = arith.divf %353, %354 : vector<2x32xf32>
    %356 = arith.mulf %341, %314 : vector<2x32xf32>
    %357 = arith.mulf %332, %346 : vector<2x32xf32>
    %358 = arith.addf %356, %357 : vector<2x32xf32>
    %359 = math.tanh %358 : vector<2x32xf32>
    %360 = arith.mulf %355, %359 : vector<2x32xf32>
    %361 = arith.index_cast %c7_i32 : i32 to index
    %c0_107 = arith.constant 0 : index
    %c0_108 = arith.constant 0 : index
    %362 = vector.load %arg10[%361, %c0_107, %c0_108] : memref<8x2x32xf32, #tpu.memory_space<vmem>>, vector<1x2x32xf32>
    %363 = vector.shape_cast %362 : vector<1x2x32xf32> to vector<2x32xf32>
    %364 = vector.shape_cast %360 : vector<2x32xf32> to vector<1x2x32xf32>
    tpu.vector_store %arg10[%361, %c0_107, %c0_108], %364 {strides = array<i32>} : memref<8x2x32xf32, #tpu.memory_space<vmem>>, vector<1x2x32xf32>,
    %c8_i32 = arith.constant 8 : i32
    %c0_109 = arith.constant 0 : index
    %c0_110 = arith.constant 0 : index
    %365 = vector.load %arg8[%c0_109, %c0_110] : memref<2x32xf32, #tpu.memory_space<vmem>>, vector<2x32xf32>
    tpu.vector_store %arg8[%c0_109, %c0_110], %360 {strides = array<i32>} : memref<2x32xf32, #tpu.memory_space<vmem>>, vector<2x32xf32>,
    %c0_111 = arith.constant 0 : index
    %c0_112 = arith.constant 0 : index
    %366 = vector.load %arg9[%c0_111, %c0_112] : memref<2x32xf32, #tpu.memory_space<vmem>>, vector<2x32xf32>
    tpu.vector_store %arg9[%c0_111, %c0_112], %358 {strides = array<i32>} : memref<2x32xf32, #tpu.memory_space<vmem>>, vector<2x32xf32>,
    %c0_113 = arith.constant 0 : index
    %c0_114 = arith.constant 0 : index
    %c0_115 = arith.constant 0 : index
    %367 = vector.load %arg10[%c0_113, %c0_114, %c0_115] : memref<8x2x32xf32, #tpu.memory_space<vmem>>, vector<8x2x32xf32>
    %c0_116 = arith.constant 0 : index
    %c0_117 = arith.constant 0 : index
    %368 = vector.load %arg5[%c0_116, %c0_117] : memref<1x32xf32, #tpu.memory_space<vmem>>, vector<1x32xf32>
    %369 = vector.shape_cast %368 : vector<1x32xf32> to vector<1x1x32xf32>
    %370 = vector.broadcast %369 : vector<1x1x32xf32> to vector<8x2x32xf32>
    %371 = arith.mulf %367, %370 : vector<8x2x32xf32>
    %cst_118 = arith.constant dense<0.000000e+00> : vector<8x2xf32>
    %372 = vector.multi_reduction <add>, %371, %cst_118 [2] : vector<8x2x32xf32> to vector<8x2xf32>
    %373 = tpu.transpose %372, [1, 0] : vector<8x2xf32> -> vector<2x8xf32>
    %c0_119 = arith.constant 0 : index
    %374 = memref.load %arg6[%c0_119] : memref<1xf32, #tpu.memory_space<smem>>
    %375 = vector.broadcast %374 : f32 to vector<2x8xf32>
    %376 = arith.addf %373, %375 : vector<2x8xf32>
    %377 = arith.negf %376 : vector<2x8xf32>
    %378 = math.exp %377 : vector<2x8xf32>
    %cst_120 = arith.constant 1.000000e+00 : f32
    %379 = vector.broadcast %cst_120 : f32 to vector<2x8xf32>
    %380 = arith.addf %379, %378 : vector<2x8xf32>
    %381 = arith.divf %379, %380 : vector<2x8xf32>
    %c0_121 = arith.constant 0 : index
    %c0_122 = arith.constant 0 : index
    %382 = vector.load %arg7[%c0_121, %c0_122] : memref<2x8xf32, #tpu.memory_space<vmem>>, vector<2x8xf32>
    tpu.vector_store %arg7[%c0_121, %c0_122], %381 {strides = array<i32>} : memref<2x8xf32, #tpu.memory_space<vmem>>, vector<2x8xf32>,
    return
  }
  func.func @transform_0(%arg0: i32) -> (i32, i32, i32, i32) {
    %c0_i32 = arith.constant 0 : i32
    %c0_i32_0 = arith.constant 0 : i32
    %c0_i32_1 = arith.constant 0 : i32
    %c0_i32_2 = arith.constant 0 : i32
    return %arg0, %c0_i32, %c0_i32_0, %c0_i32_1 : i32, i32, i32, i32
  }
  func.func @transform_1(%arg0: i32) -> (i32, i32) {
    %c0_i32 = arith.constant 0 : i32
    %c0_i32_0 = arith.constant 0 : i32
    %c0_i32_1 = arith.constant 0 : i32
    return %c0_i32, %c0_i32_0 : i32, i32
  }
  func.func @transform_2(%arg0: i32) -> (i32, i32) {
    %c0_i32 = arith.constant 0 : i32
    %c0_i32_0 = arith.constant 0 : i32
    %c0_i32_1 = arith.constant 0 : i32
    return %c0_i32, %c0_i32_0 : i32, i32
  }
  func.func @transform_3(%arg0: i32) -> (i32, i32, i32) {
    %c0_i32 = arith.constant 0 : i32
    %c0_i32_0 = arith.constant 0 : i32
    %c0_i32_1 = arith.constant 0 : i32
    %c0_i32_2 = arith.constant 0 : i32
    return %c0_i32, %c0_i32_0, %c0_i32_1 : i32, i32, i32
  }
  func.func @transform_4(%arg0: i32) -> (i32, i32) {
    %c0_i32 = arith.constant 0 : i32
    %c0_i32_0 = arith.constant 0 : i32
    %c0_i32_1 = arith.constant 0 : i32
    return %c0_i32, %c0_i32_0 : i32, i32
  }
  func.func @transform_5(%arg0: i32) -> i32 {
    %c0_i32 = arith.constant 0 : i32
    %c0_i32_0 = arith.constant 0 : i32
    return %c0_i32 : i32
  }
  func.func @transform_6(%arg0: i32) -> (i32, i32) {
    %c0_i32 = arith.constant 0 : i32
    %c0_i32_0 = arith.constant 0 : i32
    return %c0_i32, %arg0 : i32, i32
  }
}

</mosaic_0001>

<llo_original>
// kernel: tpu_custom_call.1
$region0: #{tpu_custom_call.1}
  #allocation0 [shape = 'u32[]', space=smem, size = 0x4, offset = 0x4, fixed_abs, tag = 'smem constant byte address 0x4 - core index']
  #allocation1 [shape = 'u32[72,128]{1,0:T(1,128)}', space=vmem, size = 0x9000, scoped, tag = 'internal scratch']
  #allocation2 [shape = 'f32[2,32]{1,0:T(2,128)}', space=vmem, size = 0x400, scoped, tag = 'scratch operand']
  #allocation3 [shape = 'f32[2,32]{1,0:T(2,128)}', space=vmem, size = 0x400, scoped, tag = 'scratch operand']
  #allocation4 [shape = 'f32[8,2,32]{2,1,0:T(2,128)}', space=vmem, size = 0x2000, scoped, tag = 'scratch operand']
  #allocation5 [shape = 'f32[1]{0:T(128)S(6)}', space=smem, size = 0x200, scoped, tag = 'scoped memory for tpu_custom_call.1']
  %s0 = inlined_call_operand.hbm [shape: f32[8,4,2,32], index: 0, kind: input, shape index: {}]
  %s1 = inlined_call_operand.vmem [shape: f32[2,32], index: 1, kind: input, shape index: {}]
  %s2 = inlined_call_operand.hbm [shape: f32[2,32], index: 2, kind: input, shape index: {}]
  %s3 = inlined_call_operand.hbm [shape: f32[4,32,32], index: 3, kind: input, shape index: {}]
  %s4 = inlined_call_operand.vmem [shape: f32[1,32], index: 4, kind: input, shape index: {}]
  %s5 = inlined_call_operand.<no memory space> [shape: f32[1], index: 5, kind: input, shape index: {}]
  %s6 = inlined_call_operand.hbm [shape: f32[2,8], index: 6, kind: output, shape index: {}]
  %s7 = sld [smem:[#allocation0]]
  $region50: #{tpu_custom_call.1} parent=0
    _
  %s9 = ssub.s32 1, %s7
  %s10 = scalar_select 0, %s9, %s7
  %11 = sst [smem:[#allocation5]] %s5
  $region1: #{tpu_custom_call.1} parent=0
    #allocation6 [shape = 'u8[32768]{0}', space=vmem, size = 0x8000, scoped, tag = 'input window, operand 0, single buffered']
    #allocation7 [shape = 's32[1]{0}', space=sflag, size = 0x4, scoped, tag = 'scoped memory for tpu_custom_call.1']
    #allocation8 [shape = 's32[1]{0}', space=sflag, size = 0x4, scoped, tag = 'scoped memory for tpu_custom_call.1']
    #allocation9 [shape = 'u8[1024]{0}', space=vmem, size = 0x400, scoped, tag = 'input window, operand 2, single buffered']
    #allocation10 [shape = 's32[1]{0}', space=sflag, size = 0x4, scoped, tag = 'scoped memory for tpu_custom_call.1']
    #allocation11 [shape = 'u8[65536]{0}', space=vmem, size = 0x10000, scoped, tag = 'input window, operand 3, single buffered']
    #allocation12 [shape = 'u8[1024]{0}', space=vmem, size = 0x400, scoped, tag = 'output window, operand 0, single buffered']
    %12 = vsyncpa [#allocation7], 0
    %13 = vsyncpa [#allocation10], 0
    %14 = vsyncpa [#allocation8], 0
    // Predicated region
    $region2: #{tpu_custom_call.1} parent=1 // pred_check
      _
    $region3: #{tpu_custom_call.1} parent=1 // pred_check_branch
      %16 = sbr.rel (0) target = $region5
    $region4: #{tpu_custom_call.1} parent=1 // pred_region
      %18 = vsyncadd [#allocation7], 0
      %s19 = sshll.u32 %s0, 4
      %s20 = int_to_ptr.hbm [resolvable:$true] %s19
      %s21 = sshll.u32 [#allocation6], 4
      %s22 = int_to_ptr.vmem [resolvable:$true] %s21
      %27 = dma.hbm_to_vmem [thread:$0]  %s20, 1024, %s22, [#allocation7], 32, 32, 2
    $region5: #{tpu_custom_call.1} parent=1 // pred_fallthru
      _
    // Predicated region
    $region6: #{tpu_custom_call.1} parent=1 // pred_check
      _
    $region7: #{tpu_custom_call.1} parent=1 // pred_check_branch
      %29 = sbr.rel (0) target = $region9
    $region8: #{tpu_custom_call.1} parent=1 // pred_region
      _
    $region9: #{tpu_custom_call.1} parent=1 // pred_fallthru
      _
    // Predicated region
    $region10: #{tpu_custom_call.1} parent=1 // pred_check
      _
    $region11: #{tpu_custom_call.1} parent=1 // pred_check_branch
      %31 = sbr.rel (0) target = $region13
    $region12: #{tpu_custom_call.1} parent=1 // pred_region
      %33 = vsyncadd [#allocation10], 0
      %s35 = sshll.u32 %s2, 4
      %s36 = int_to_ptr.hbm [resolvable:$true] %s35
      %s37 = sshll.u32 [#allocation9], 4
      %s38 = int_to_ptr.vmem [resolvable:$true] %s37
      %40 = dma.hbm_to_vmem [thread:$0]  %s36, 32, %s38, [#allocation10]
    $region13: #{tpu_custom_call.1} parent=1 // pred_fallthru
      _
    // Predicated region
    $region14: #{tpu_custom_call.1} parent=1 // pred_check
      _
    $region15: #{tpu_custom_call.1} parent=1 // pred_check_branch
      %42 = sbr.rel (0) target = $region17
    $region16: #{tpu_custom_call.1} parent=1 // pred_region
      %44 = vsyncadd [#allocation10], 0
      %s45 = sshll.u32 %s3, 4
      %s46 = int_to_ptr.hbm [resolvable:$true] %s45
      %s47 = sshll.u32 [#allocation11], 4
      %s48 = int_to_ptr.vmem [resolvable:$true] %s47
      %53 = dma.hbm_to_vmem [thread:$0]  %s46, 2048, %s48, [#allocation10], 128, 128, 8
    $region17: #{tpu_custom_call.1} parent=1 // pred_fallthru
      _
    // Predicated region
    $region18: #{tpu_custom_call.1} parent=1 // pred_check
      _
    $region19: #{tpu_custom_call.1} parent=1 // pred_check_branch
      %55 = sbr.rel (0) target = $region21
    $region20: #{tpu_custom_call.1} parent=1 // pred_region
      _
    $region21: #{tpu_custom_call.1} parent=1 // pred_fallthru
      _
    // Predicated region
    $region22: #{tpu_custom_call.1} parent=1 // pred_check
      _
    $region23: #{tpu_custom_call.1} parent=1 // pred_check_branch
      %57 = sbr.rel (0) target = $region25
    $region24: #{tpu_custom_call.1} parent=1 // pred_region
      _
    $region25: #{tpu_custom_call.1} parent=1 // pred_fallthru
      _
    // Predicated region
    $region26: #{tpu_custom_call.1} parent=1 // pred_check
      _
    $region27: #{tpu_custom_call.1} parent=1 // pred_check_branch
      %59 = sbr.rel (0) target = $region29
    $region28: #{tpu_custom_call.1} parent=1 // pred_region
      %61 = dma.done [#allocation7], 1024
    $region29: #{tpu_custom_call.1} parent=1 // pred_fallthru
      _
    // Predicated region
    $region30: #{tpu_custom_call.1} parent=1 // pred_check
      _
    $region31: #{tpu_custom_call.1} parent=1 // pred_check_branch
      %63 = sbr.rel (0) target = $region33
    $region32: #{tpu_custom_call.1} parent=1 // pred_region
      %65 = dma.done [#allocation10], 32
    $region33: #{tpu_custom_call.1} parent=1 // pred_fallthru
      _
    // Predicated region
    $region34: #{tpu_custom_call.1} parent=1 // pred_check
      _
    $region35: #{tpu_custom_call.1} parent=1 // pred_check_branch
      %67 = sbr.rel (0) target = $region37
    $region36: #{tpu_custom_call.1} parent=1 // pred_region
      %69 = dma.done [#allocation10], 2048
    $region37: #{tpu_custom_call.1} parent=1 // pred_fallthru
      _
    %p70 = scmp.eq.s32.totalorder 0, 0
    // Predicated region
    $region38: #{tpu_custom_call.1} parent=1 // pred_check
      %p71 = pneg %p70
    $region39: #{tpu_custom_call.1} parent=1 // pred_check_branch
      %73 = sbr.rel (%p71) target = $region41
    $region40: #{tpu_custom_call.1} parent=1 // pred_region
      %v74 = vld [vmem:[%s1] sm:$0x3]
      %vm75 = vcmask 254976
      %76 = vst.msk [vmem:[#allocation2] sm:$0x3] %vm75, %v74
      %v77 = vld [vmem:[#allocation9] sm:$0x3]
      %78 = vst.msk [vmem:[#allocation3] sm:$0x3] %vm75, %v77
    $region41: #{tpu_custom_call.1} parent=1 // pred_fallthru
      _
    %v79 = vld [vmem:[#allocation11] sm:$0xff]
    %v80 = vld [vmem:[#allocation11 + $0x8] sm:$0xff]
    %v81 = vld [vmem:[#allocation11 + $0x10] sm:$0xff]
    %v82 = vld [vmem:[#allocation11 + $0x18] sm:$0xff]
    %s83 = scalar_lea.vmem [#allocation11], 32
    %v84 = vld [vmem:[%s83] sm:$0xff]
    %v85 = vld [vmem:[%s83 + $0x8] sm:$0xff]
    %v86 = vld [vmem:[%s83 + $0x10] sm:$0xff]
    %v87 = vld [vmem:[%s83 + $0x18] sm:$0xff]
    %s88 = scalar_lea.vmem [#allocation11], 64
    %v89 = vld [vmem:[%s88] sm:$0xff]
    %v90 = vld [vmem:[%s88 + $0x8] sm:$0xff]
    %v91 = vld [vmem:[%s88 + $0x10] sm:$0xff]
    %v92 = vld [vmem:[%s88 + $0x18] sm:$0xff]
    %s93 = scalar_lea.vmem [#allocation11], 96
    %v94 = vld [vmem:[%s93] sm:$0xff]
    %v95 = vld [vmem:[%s93 + $0x8] sm:$0xff]
    %v96 = vld [vmem:[%s93 + $0x10] sm:$0xff]
    %v97 = vld [vmem:[%s93 + $0x18] sm:$0xff]
    %v98 = vld [vmem:[#allocation2] sm:$0x3]
    %v99 = vld [vmem:[#allocation3] sm:$0x3]
    %v100 = vld [vmem:[#allocation6] sm:$0x3]
    %v101 = vld [vmem:[#allocation6 + $0x2] sm:$0x3]
    %v102 = vld [vmem:[#allocation6 + $0x4] sm:$0x3]
    %v103 = vld [vmem:[#allocation6 + $0x6] sm:$0x3]
    %vm104 = vcmask 261120
    %v106 = vsel %vm104, %v98, 0
    %108 = vmatpush.msra.mxu0 0.0
    %109 = vmatpush.msra.mxu0 0.0
    %110 = vmatpush.msra.mxu0 0.0
    %111 = vmatpush.msra.mxu0 0.0
    %112 = vmatpush.msra.mxu0 0.0
    %113 = vmatpush.msra.mxu0 0.0
    %114 = vmatpush.msra.mxu0 0.0
    %115 = vmatpush.msra.mxu0 0.0
    %116 = vmatpush.msra.mxu0 0.0
    %117 = vmatpush.msra.mxu0 0.0
    %118 = vmatpush.msra.mxu0 0.0
    %119 = vmatpush.msra.mxu0 0.0
    %120 = vmatpush.msra.mxu0 %v82
    %121 = vmatpush.msra.mxu0 %v81
    %122 = vmatpush.msra.mxu0 %v80
    %123 = vmatpush.msra.mxu0 %v79
    %124 = vmatmul.f32.gmra.mxu0 %v106
    %v125 = vpop.f32.mrf.mxu0
    %v126 = vadd.f32 0.0, %v125
    %127 = vdwg.mxu0
    %v128 = vadd.f32 %v100, %v126
    %v129 = vxor.u32 %v128, 2147483648
    %v130 = vmul.f32 %v129, 1.442695
    %v131 = vpow.pop %v130
    %v132 = vadd.f32 %v131, 1.0
    %v133 = vrcp.pop %v132
    %v134 = vmul.f32 %v132, %v133
    %v135 = vsub.f32 1.0, %v134
    %v136 = vmul.f32 %v133, %v135
    %v137 = vadd.f32 %v133, %v136
    %vm138 = vweird.f32 %v132
    %vm139 = vweird.f32 %v133
    %vm140 = vmor %vm138, %vm139
    %v141 = vsel %vm140, %v133, %v137
    %v142 = vand.u32 2147483647, %v132
    %vm143 = vcmp.eq.f32.partialorder %v142, 8.507059e+37
    %v144 = vand.u32 %v132, 2147483648
    %v145 = vor.u32 1.1754944e-38, %v144
    %v146 = vsel %vm143, %v145, %v141
    %v147 = vmul.f32 1.0, %v146
    %148 = vmatpush.msra.mxu0 0.0
    %149 = vmatpush.msra.mxu0 0.0
    %150 = vmatpush.msra.mxu0 0.0
    %151 = vmatpush.msra.mxu0 0.0
    %152 = vmatpush.msra.mxu0 0.0
    %153 = vmatpush.msra.mxu0 0.0
    %154 = vmatpush.msra.mxu0 0.0
    %155 = vmatpush.msra.mxu0 0.0
    %156 = vmatpush.msra.mxu0 0.0
    %157 = vmatpush.msra.mxu0 0.0
    %158 = vmatpush.msra.mxu0 0.0
    %159 = vmatpush.msra.mxu0 0.0
    %160 = vmatpush.msra.mxu0 %v87
    %161 = vmatpush.msra.mxu0 %v86
    %162 = vmatpush.msra.mxu0 %v85
    %163 = vmatpush.msra.mxu0 %v84
    %164 = vmatmul.f32.gmra.mxu0 %v106
    %v165 = vpop.f32.mrf.mxu0
    %v166 = vadd.f32 0.0, %v165
    %167 = vdwg.mxu0
    %v168 = vadd.f32 %v101, %v166
    %v169 = vxor.u32 %v168, 2147483648
    %v170 = vmul.f32 %v169, 1.442695
    %v171 = vpow.pop %v170
    %v172 = vadd.f32 %v171, 1.0
    %v173 = vrcp.pop %v172
    %v174 = vmul.f32 %v172, %v173
    %v175 = vsub.f32 1.0, %v174
    %v176 = vmul.f32 %v173, %v175
    %v177 = vadd.f32 %v173, %v176
    %vm178 = vweird.f32 %v172
    %vm179 = vweird.f32 %v173
    %vm180 = vmor %vm178, %vm179
    %v181 = vsel %vm180, %v173, %v177
    %v182 = vand.u32 2147483647, %v172
    %vm183 = vcmp.eq.f32.partialorder %v182, 8.507059e+37
    %v184 = vand.u32 %v172, 2147483648
    %v185 = vor.u32 1.1754944e-38, %v184
    %v186 = vsel %vm183, %v185, %v181
    %v187 = vmul.f32 1.0, %v186
    %188 = vmatpush.msra.mxu0 0.0
    %189 = vmatpush.msra.mxu0 0.0
    %190 = vmatpush.msra.mxu0 0.0
    %191 = vmatpush.msra.mxu0 0.0
    %192 = vmatpush.msra.mxu0 0.0
    %193 = vmatpush.msra.mxu0 0.0
    %194 = vmatpush.msra.mxu0 0.0
    %195 = vmatpush.msra.mxu0 0.0
    %196 = vmatpush.msra.mxu0 0.0
    %197 = vmatpush.msra.mxu0 0.0
    %198 = vmatpush.msra.mxu0 0.0
    %199 = vmatpush.msra.mxu0 0.0
    %200 = vmatpush.msra.mxu0 %v92
    %201 = vmatpush.msra.mxu0 %v91
    %202 = vmatpush.msra.mxu0 %v90
    %203 = vmatpush.msra.mxu0 %v89
    %204 = vmatmul.f32.gmra.mxu0 %v106
    %v205 = vpop.f32.mrf.mxu0
    %v206 = vadd.f32 0.0, %v205
    %207 = vdwg.mxu0
    %v208 = vadd.f32 %v102, %v206
    %v209 = vtanh.pop %v208
    %210 = vmatpush.msra.mxu0 0.0
    %211 = vmatpush.msra.mxu0 0.0
    %212 = vmatpush.msra.mxu0 0.0
    %213 = vmatpush.msra.mxu0 0.0
    %214 = vmatpush.msra.mxu0 0.0
    %215 = vmatpush.msra.mxu0 0.0
    %216 = vmatpush.msra.mxu0 0.0
    %217 = vmatpush.msra.mxu0 0.0
    %218 = vmatpush.msra.mxu0 0.0
    %219 = vmatpush.msra.mxu0 0.0
    %220 = vmatpush.msra.mxu0 0.0
    %221 = vmatpush.msra.mxu0 0.0
    %222 = vmatpush.msra.mxu0 %v97
    %223 = vmatpush.msra.mxu0 %v96
    %224 = vmatpush.msra.mxu0 %v95
    %225 = vmatpush.msra.mxu0 %v94
    %226 = vmatmul.f32.gmra.mxu0 %v106
    %v227 = vpop.f32.mrf.mxu0
    %v228 = vadd.f32 0.0, %v227
    %229 = vdwg.mxu0
    %v230 = vadd.f32 %v103, %v228
    %v231 = vxor.u32 %v230, 2147483648
    %v232 = vmul.f32 %v231, 1.442695
    %v233 = vpow.pop %v232
    %v234 = vadd.f32 %v233, 1.0
    %v235 = vrcp.pop %v234
    %v236 = vmul.f32 %v234, %v235
    %v237 = vsub.f32 1.0, %v236
    %v238 = vmul.f32 %v235, %v237
    %v239 = vadd.f32 %v235, %v238
    %vm240 = vweird.f32 %v234
    %vm241 = vweird.f32 %v235
    %vm242 = vmor %vm240, %vm241
    %v243 = vsel %vm242, %v235, %v239
    %v244 = vand.u32 2147483647, %v234
    %vm245 = vcmp.eq.f32.partialorder %v244, 8.507059e+37
    %v246 = vand.u32 %v234, 2147483648
    %v247 = vor.u32 1.1754944e-38, %v246
    %v248 = vsel %vm245, %v247, %v243
    %v249 = vmul.f32 1.0, %v248
    %v250 = vmul.f32 %v187, %v99
    %v251 = vmul.f32 %v147, %v209
    %v252 = vadd.f32 %v250, %v251
    %v253 = vtanh.pop %v252
    %v254 = vmul.f32 %v249, %v253
    %vm255 = vcmask 254976
    %256 = vst.msk [vmem:[#allocation4] sm:$0x3] %vm255, %v254
    %s257 = scalar_lea.vmem [#allocation6], 8
    %v258 = vld [vmem:[%s257] sm:$0x3]
    %v259 = vld [vmem:[%s257 + $0x2] sm:$0x3]
    %v260 = vld [vmem:[%s257 + $0x4] sm:$0x3]
    %v261 = vld [vmem:[%s257 + $0x6] sm:$0x3]
    %v263 = vsel %vm104, %v254, 0
    %265 = vmatpush.msra.mxu0 0.0
    %266 = vmatpush.msra.mxu0 0.0
    %267 = vmatpush.msra.mxu0 0.0
    %268 = vmatpush.msra.mxu0 0.0
    %269 = vmatpush.msra.mxu0 0.0
    %270 = vmatpush.msra.mxu0 0.0
    %271 = vmatpush.msra.mxu0 0.0
    %272 = vmatpush.msra.mxu0 0.0
    %273 = vmatpush.msra.mxu0 0.0
    %274 = vmatpush.msra.mxu0 0.0
    %275 = vmatpush.msra.mxu0 0.0
    %276 = vmatpush.msra.mxu0 0.0
    %277 = vmatpush.msra.mxu0 %v82
    %278 = vmatpush.msra.mxu0 %v81
    %279 = vmatpush.msra.mxu0 %v80
    %280 = vmatpush.msra.mxu0 %v79
    %281 = vmatmul.f32.gmra.mxu0 %v263
    %v282 = vpop.f32.mrf.mxu0
    %v283 = vadd.f32 0.0, %v282
    %284 = vdwg.mxu0
    %v285 = vadd.f32 %v258, %v283
    %v286 = vxor.u32 %v285, 2147483648
    %v287 = vmul.f32 %v286, 1.442695
    %v288 = vpow.pop %v287
    %v289 = vadd.f32 %v288, 1.0
    %v290 = vrcp.pop %v289
    %v291 = vmul.f32 %v289, %v290
    %v292 = vsub.f32 1.0, %v291
    %v293 = vmul.f32 %v290, %v292
    %v294 = vadd.f32 %v290, %v293
    %vm295 = vweird.f32 %v289
    %vm296 = vweird.f32 %v290
    %vm297 = vmor %vm295, %vm296
    %v298 = vsel %vm297, %v290, %v294
    %v299 = vand.u32 2147483647, %v289
    %vm300 = vcmp.eq.f32.partialorder %v299, 8.507059e+37
    %v301 = vand.u32 %v289, 2147483648
    %v302 = vor.u32 1.1754944e-38, %v301
    %v303 = vsel %vm300, %v302, %v298
    %v304 = vmul.f32 1.0, %v303
    %305 = vmatpush.msra.mxu0 0.0
    %306 = vmatpush.msra.mxu0 0.0
    %307 = vmatpush.msra.mxu0 0.0
    %308 = vmatpush.msra.mxu0 0.0
    %309 = vmatpush.msra.mxu0 0.0
    %310 = vmatpush.msra.mxu0 0.0
    %311 = vmatpush.msra.mxu0 0.0
    %312 = vmatpush.msra.mxu0 0.0
    %313 = vmatpush.msra.mxu0 0.0
    %314 = vmatpush.msra.mxu0 0.0
    %315 = vmatpush.msra.mxu0 0.0
    %316 = vmatpush.msra.mxu0 0.0
    %317 = vmatpush.msra.mxu0 %v87
    %318 = vmatpush.msra.mxu0 %v86
    %319 = vmatpush.msra.mxu0 %v85
    %320 = vmatpush.msra.mxu0 %v84
    %321 = vmatmul.f32.gmra.mxu0 %v263
    %v322 = vpop.f32.mrf.mxu0
    %v323 = vadd.f32 0.0, %v322
    %324 = vdwg.mxu0
    %v325 = vadd.f32 %v259, %v323
    %v326 = vxor.u32 %v325, 2147483648
    %v327 = vmul.f32 %v326, 1.442695
    %v328 = vpow.pop %v327
    %v329 = vadd.f32 %v328, 1.0
    %v330 = vrcp.pop %v329
    %v331 = vmul.f32 %v329, %v330
    %v332 = vsub.f32 1.0, %v331
    %v333 = vmul.f32 %v330, %v332
    %v334 = vadd.f32 %v330, %v333
    %vm335 = vweird.f32 %v329
    %vm336 = vweird.f32 %v330
    %vm337 = vmor %vm335, %vm336
    %v338 = vsel %vm337, %v330, %v334
    %v339 = vand.u32 2147483647, %v329
    %vm340 = vcmp.eq.f32.partialorder %v339, 8.507059e+37
    %v341 = vand.u32 %v329, 2147483648
    %v342 = vor.u32 1.1754944e-38, %v341
    %v343 = vsel %vm340, %v342, %v338
    %v344 = vmul.f32 1.0, %v343
    %345 = vmatpush.msra.mxu0 0.0
    %346 = vmatpush.msra.mxu0 0.0
    %347 = vmatpush.msra.mxu0 0.0
    %348 = vmatpush.msra.mxu0 0.0
    %349 = vmatpush.msra.mxu0 0.0
    %350 = vmatpush.msra.mxu0 0.0
    %351 = vmatpush.msra.mxu0 0.0
    %352 = vmatpush.msra.mxu0 0.0
    %353 = vmatpush.msra.mxu0 0.0
    %354 = vmatpush.msra.mxu0 0.0
    %355 = vmatpush.msra.mxu0 0.0
    %356 = vmatpush.msra.mxu0 0.0
    %357 = vmatpush.msra.mxu0 %v92
    %358 = vmatpush.msra.mxu0 %v91
    %359 = vmatpush.msra.mxu0 %v90
    %360 = vmatpush.msra.mxu0 %v89
    %361 = vmatmul.f32.gmra.mxu0 %v263
    %v362 = vpop.f32.mrf.mxu0
    %v363 = vadd.f32 0.0, %v362
    %364 = vdwg.mxu0
    %v365 = vadd.f32 %v260, %v363
    %v366 = vtanh.pop %v365
    %367 = vmatpush.msra.mxu0 0.0
    %368 = vmatpush.msra.mxu0 0.0
    %369 = vmatpush.msra.mxu0 0.0
    %370 = vmatpush.msra.mxu0 0.0
    %371 = vmatpush.msra.mxu0 0.0
    %372 = vmatpush.msra.mxu0 0.0
    %373 = vmatpush.msra.mxu0 0.0
    %374 = vmatpush.msra.mxu0 0.0
    %375 = vmatpush.msra.mxu0 0.0
    %376 = vmatpush.msra.mxu0 0.0
    %377 = vmatpush.msra.mxu0 0.0
    %378 = vmatpush.msra.mxu0 0.0
    %379 = vmatpush.msra.mxu0 %v97
    %380 = vmatpush.msra.mxu0 %v96
    %381 = vmatpush.msra.mxu0 %v95
    %382 = vmatpush.msra.mxu0 %v94
    %383 = vmatmul.f32.gmra.mxu0 %v263
    %v384 = vpop.f32.mrf.mxu0
    %v385 = vadd.f32 0.0, %v384
    %386 = vdwg.mxu0
    %v387 = vadd.f32 %v261, %v385
    %v388 = vxor.u32 %v387, 2147483648
    %v389 = vmul.f32 %v388, 1.442695
    %v390 = vpow.pop %v389
    %v391 = vadd.f32 %v390, 1.0
    %v392 = vrcp.pop %v391
    %v393 = vmul.f32 %v391, %v392
    %v394 = vsub.f32 1.0, %v393
    %v395 = vmul.f32 %v392, %v394
    %v396 = vadd.f32 %v392, %v395
    %vm397 = vweird.f32 %v391
    %vm398 = vweird.f32 %v392
    %vm399 = vmor %vm397, %vm398
    %v400 = vsel %vm399, %v392, %v396
    %v401 = vand.u32 2147483647, %v391
    %vm402 = vcmp.eq.f32.partialorder %v401, 8.507059e+37
    %v403 = vand.u32 %v391, 2147483648
    %v404 = vor.u32 1.1754944e-38, %v403
    %v405 = vsel %vm402, %v404, %v400
    %v406 = vmul.f32 1.0, %v405
    %v407 = vmul.f32 %v344, %v252
    %v408 = vmul.f32 %v304, %v366
    %v409 = vadd.f32 %v407, %v408
    %v410 = vtanh.pop %v409
    %v411 = vmul.f32 %v406, %v410
    %s412 = scalar_lea.vmem [#allocation4], 2
    %413 = vst.msk [vmem:[%s412] sm:$0x3] %vm255, %v411
    %s414 = scalar_lea.vmem [#allocation6], 16
    %v415 = vld [vmem:[%s414] sm:$0x3]
    %v416 = vld [vmem:[%s414 + $0x2] sm:$0x3]
    %v417 = vld [vmem:[%s414 + $0x4] sm:$0x3]
    %v418 = vld [vmem:[%s414 + $0x6] sm:$0x3]
    %v420 = vsel %vm104, %v411, 0
    %422 = vmatpush.msra.mxu0 0.0
    %423 = vmatpush.msra.mxu0 0.0
    %424 = vmatpush.msra.mxu0 0.0
    %425 = vmatpush.msra.mxu0 0.0
    %426 = vmatpush.msra.mxu0 0.0
    %427 = vmatpush.msra.mxu0 0.0
    %428 = vmatpush.msra.mxu0 0.0
    %429 = vmatpush.msra.mxu0 0.0
    %430 = vmatpush.msra.mxu0 0.0
    %431 = vmatpush.msra.mxu0 0.0
    %432 = vmatpush.msra.mxu0 0.0
    %433 = vmatpush.msra.mxu0 0.0
    %434 = vmatpush.msra.mxu0 %v82
    %435 = vmatpush.msra.mxu0 %v81
    %436 = vmatpush.msra.mxu0 %v80
    %437 = vmatpush.msra.mxu0 %v79
    %438 = vmatmul.f32.gmra.mxu0 %v420
    %v439 = vpop.f32.mrf.mxu0
    %v440 = vadd.f32 0.0, %v439
    %441 = vdwg.mxu0
    %v442 = vadd.f32 %v415, %v440
    %v443 = vxor.u32 %v442, 2147483648
    %v444 = vmul.f32 %v443, 1.442695
    %v445 = vpow.pop %v444
    %v446 = vadd.f32 %v445, 1.0
    %v447 = vrcp.pop %v446
    %v448 = vmul.f32 %v446, %v447
    %v449 = vsub.f32 1.0, %v448
    %v450 = vmul.f32 %v447, %v449
    %v451 = vadd.f32 %v447, %v450
    %vm452 = vweird.f32 %v446
    %vm453 = vweird.f32 %v447
    %vm454 = vmor %vm452, %vm453
    %v455 = vsel %vm454, %v447, %v451
    %v456 = vand.u32 2147483647, %v446
    %vm457 = vcmp.eq.f32.partialorder %v456, 8.507059e+37
    %v458 = vand.u32 %v446, 2147483648
    %v459 = vor.u32 1.1754944e-38, %v458
    %v460 = vsel %vm457, %v459, %v455
    %v461 = vmul.f32 1.0, %v460
    %462 = vmatpush.msra.mxu0 0.0
    %463 = vmatpush.msra.mxu0 0.0
    %464 = vmatpush.msra.mxu0 0.0
    %465 = vmatpush.msra.mxu0 0.0
    %466 = vmatpush.msra.mxu0 0.0
    %467 = vmatpush.msra.mxu0 0.0
    %468 = vmatpush.msra.mxu0 0.0
    %469 = vmatpush.msra.mxu0 0.0
    %470 = vmatpush.msra.mxu0 0.0
    %471 = vmatpush.msra.mxu0 0.0
    %472 = vmatpush.msra.mxu0 0.0
    %473 = vmatpush.msra.mxu0 0.0
    %474 = vmatpush.msra.mxu0 %v87
    %475 = vmatpush.msra.mxu0 %v86
    %476 = vmatpush.msra.mxu0 %v85
    %477 = vmatpush.msra.mxu0 %v84
    %478 = vmatmul.f32.gmra.mxu0 %v420
    %v479 = vpop.f32.mrf.mxu0
    %v480 = vadd.f32 0.0, %v479
    %481 = vdwg.mxu0
    %v482 = vadd.f32 %v416, %v480
    %v483 = vxor.u32 %v482, 2147483648
    %v484 = vmul.f32 %v483, 1.442695
    %v485 = vpow.pop %v484
    %v486 = vadd.f32 %v485, 1.0
    %v487 = vrcp.pop %v486
    %v488 = vmul.f32 %v486, %v487
    %v489 = vsub.f32 1.0, %v488
    %v490 = vmul.f32 %v487, %v489
    %v491 = vadd.f32 %v487, %v490
    %vm492 = vweird.f32 %v486
    %vm493 = vweird.f32 %v487
    %vm494 = vmor %vm492, %vm493
    %v495 = vsel %vm494, %v487, %v491
    %v496 = vand.u32 2147483647, %v486
    %vm497 = vcmp.eq.f32.partialorder %v496, 8.507059e+37
    %v498 = vand.u32 %v486, 2147483648
    %v499 = vor.u32 1.1754944e-38, %v498
    %v500 = vsel %vm497, %v499, %v495
    %v501 = vmul.f32 1.0, %v500
    %502 = vmatpush.msra.mxu0 0.0
    %503 = vmatpush.msra.mxu0 0.0
    %504 = vmatpush.msra.mxu0 0.0
    %505 = vmatpush.msra.mxu0 0.0
    %506 = vmatpush.msra.mxu0 0.0
    %507 = vmatpush.msra.mxu0 0.0
    %508 = vmatpush.msra.mxu0 0.0
    %509 = vmatpush.msra.mxu0 0.0
    %510 = vmatpush.msra.mxu0 0.0
    %511 = vmatpush.msra.mxu0 0.0
    %512 = vmatpush.msra.mxu0 0.0
    %513 = vmatpush.msra.mxu0 0.0
    %514 = vmatpush.msra.mxu0 %v92
    %515 = vmatpush.msra.mxu0 %v91
    %516 = vmatpush.msra.mxu0 %v90
    %517 = vmatpush.msra.mxu0 %v89
    %518 = vmatmul.f32.gmra.mxu0 %v420
    %v519 = vpop.f32.mrf.mxu0
    %v520 = vadd.f32 0.0, %v519
    %521 = vdwg.mxu0
    %v522 = vadd.f32 %v417, %v520
    %v523 = vtanh.pop %v522
    %524 = vmatpush.msra.mxu0 0.0
    %525 = vmatpush.msra.mxu0 0.0
    %526 = vmatpush.msra.mxu0 0.0
    %527 = vmatpush.msra.mxu0 0.0
    %528 = vmatpush.msra.mxu0 0.0
    %529 = vmatpush.msra.mxu0 0.0
    %530 = vmatpush.msra.mxu0 0.0
    %531 = vmatpush.msra.mxu0 0.0
    %532 = vmatpush.msra.mxu0 0.0
    %533 = vmatpush.msra.mxu0 0.0
    %534 = vmatpush.msra.mxu0 0.0
    %535 = vmatpush.msra.mxu0 0.0
    %536 = vmatpush.msra.mxu0 %v97
    %537 = vmatpush.msra.mxu0 %v96
    %538 = vmatpush.msra.mxu0 %v95
    %539 = vmatpush.msra.mxu0 %v94
    %540 = vmatmul.f32.gmra.mxu0 %v420
    %v541 = vpop.f32.mrf.mxu0
    %v542 = vadd.f32 0.0, %v541
    %543 = vdwg.mxu0
    %v544 = vadd.f32 %v418, %v542
    %v545 = vxor.u32 %v544, 2147483648
    %v546 = vmul.f32 %v545, 1.442695
    %v547 = vpow.pop %v546
    %v548 = vadd.f32 %v547, 1.0
    %v549 = vrcp.pop %v548
    %v550 = vmul.f32 %v548, %v549
    %v551 = vsub.f32 1.0, %v550
    %v552 = vmul.f32 %v549, %v551
    %v553 = vadd.f32 %v549, %v552
    %vm554 = vweird.f32 %v548
    %vm555 = vweird.f32 %v549
    %vm556 = vmor %vm554, %vm555
    %v557 = vsel %vm556, %v549, %v553
    %v558 = vand.u32 2147483647, %v548
    %vm559 = vcmp.eq.f32.partialorder %v558, 8.507059e+37
    %v560 = vand.u32 %v548, 2147483648
    %v561 = vor.u32 1.1754944e-38, %v560
    %v562 = vsel %vm559, %v561, %v557
    %v563 = vmul.f32 1.0, %v562
    %v564 = vmul.f32 %v501, %v409
    %v565 = vmul.f32 %v461, %v523
    %v566 = vadd.f32 %v564, %v565
    %v567 = vtanh.pop %v566
    %v568 = vmul.f32 %v563, %v567
    %s569 = scalar_lea.vmem [#allocation4], 4
    %570 = vst.msk [vmem:[%s569] sm:$0x3] %vm255, %v568
    %s571 = scalar_lea.vmem [#allocation6], 24
    %v572 = vld [vmem:[%s571] sm:$0x3]
    %v573 = vld [vmem:[%s571 + $0x2] sm:$0x3]
    %v574 = vld [vmem:[%s571 + $0x4] sm:$0x3]
    %v575 = vld [vmem:[%s571 + $0x6] sm:$0x3]
    %v577 = vsel %vm104, %v568, 0
    %579 = vmatpush.msra.mxu0 0.0
    %580 = vmatpush.msra.mxu0 0.0
    %581 = vmatpush.msra.mxu0 0.0
    %582 = vmatpush.msra.mxu0 0.0
    %583 = vmatpush.msra.mxu0 0.0
    %584 = vmatpush.msra.mxu0 0.0
    %585 = vmatpush.msra.mxu0 0.0
    %586 = vmatpush.msra.mxu0 0.0
    %587 = vmatpush.msra.mxu0 0.0
    %588 = vmatpush.msra.mxu0 0.0
    %589 = vmatpush.msra.mxu0 0.0
    %590 = vmatpush.msra.mxu0 0.0
    %591 = vmatpush.msra.mxu0 %v82
    %592 = vmatpush.msra.mxu0 %v81
    %593 = vmatpush.msra.mxu0 %v80
    %594 = vmatpush.msra.mxu0 %v79
    %595 = vmatmul.f32.gmra.mxu0 %v577
    %v596 = vpop.f32.mrf.mxu0
    %v597 = vadd.f32 0.0, %v596
    %598 = vdwg.mxu0
    %v599 = vadd.f32 %v572, %v597
    %v600 = vxor.u32 %v599, 2147483648
    %v601 = vmul.f32 %v600, 1.442695
    %v602 = vpow.pop %v601
    %v603 = vadd.f32 %v602, 1.0
    %v604 = vrcp.pop %v603
    %v605 = vmul.f32 %v603, %v604
    %v606 = vsub.f32 1.0, %v605
    %v607 = vmul.f32 %v604, %v606
    %v608 = vadd.f32 %v604, %v607
    %vm609 = vweird.f32 %v603
    %vm610 = vweird.f32 %v604
    %vm611 = vmor %vm609, %vm610
    %v612 = vsel %vm611, %v604, %v608
    %v613 = vand.u32 2147483647, %v603
    %vm614 = vcmp.eq.f32.partialorder %v613, 8.507059e+37
    %v615 = vand.u32 %v603, 2147483648
    %v616 = vor.u32 1.1754944e-38, %v615
    %v617 = vsel %vm614, %v616, %v612
    %v618 = vmul.f32 1.0, %v617
    %619 = vmatpush.msra.mxu0 0.0
    %620 = vmatpush.msra.mxu0 0.0
    %621 = vmatpush.msra.mxu0 0.0
    %622 = vmatpush.msra.mxu0 0.0
    %623 = vmatpush.msra.mxu0 0.0
    %624 = vmatpush.msra.mxu0 0.0
    %625 = vmatpush.msra.mxu0 0.0
    %626 = vmatpush.msra.mxu0 0.0
    %627 = vmatpush.msra.mxu0 0.0
    %628 = vmatpush.msra.mxu0 0.0
    %629 = vmatpush.msra.mxu0 0.0
    %630 = vmatpush.msra.mxu0 0.0
    %631 = vmatpush.msra.mxu0 %v87
    %632 = vmatpush.msra.mxu0 %v86
    %633 = vmatpush.msra.mxu0 %v85
    %634 = vmatpush.msra.mxu0 %v84
    %635 = vmatmul.f32.gmra.mxu0 %v577
    %v636 = vpop.f32.mrf.mxu0
    %v637 = vadd.f32 0.0, %v636
    %638 = vdwg.mxu0
    %v639 = vadd.f32 %v573, %v637
    %v640 = vxor.u32 %v639, 2147483648
    %v641 = vmul.f32 %v640, 1.442695
    %v642 = vpow.pop %v641
    %v643 = vadd.f32 %v642, 1.0
    %v644 = vrcp.pop %v643
    %v645 = vmul.f32 %v643, %v644
    %v646 = vsub.f32 1.0, %v645
    %v647 = vmul.f32 %v644, %v646
    %v648 = vadd.f32 %v644, %v647
    %vm649 = vweird.f32 %v643
    %vm650 = vweird.f32 %v644
    %vm651 = vmor %vm649, %vm650
    %v652 = vsel %vm651, %v644, %v648
    %v653 = vand.u32 2147483647, %v643
    %vm654 = vcmp.eq.f32.partialorder %v653, 8.507059e+37
    %v655 = vand.u32 %v643, 2147483648
    %v656 = vor.u32 1.1754944e-38, %v655
    %v657 = vsel %vm654, %v656, %v652
    %v658 = vmul.f32 1.0, %v657
    %659 = vmatpush.msra.mxu0 0.0
    %660 = vmatpush.msra.mxu0 0.0
    %661 = vmatpush.msra.mxu0 0.0
    %662 = vmatpush.msra.mxu0 0.0
    %663 = vmatpush.msra.mxu0 0.0
    %664 = vmatpush.msra.mxu0 0.0
    %665 = vmatpush.msra.mxu0 0.0
    %666 = vmatpush.msra.mxu0 0.0
    %667 = vmatpush.msra.mxu0 0.0
    %668 = vmatpush.msra.mxu0 0.0
    %669 = vmatpush.msra.mxu0 0.0
    %670 = vmatpush.msra.mxu0 0.0
    %671 = vmatpush.msra.mxu0 %v92
    %672 = vmatpush.msra.mxu0 %v91
    %673 = vmatpush.msra.mxu0 %v90
    %674 = vmatpush.msra.mxu0 %v89
    %675 = vmatmul.f32.gmra.mxu0 %v577
    %v676 = vpop.f32.mrf.mxu0
    %v677 = vadd.f32 0.0, %v676
    %678 = vdwg.mxu0
    %v679 = vadd.f32 %v574, %v677
    %v680 = vtanh.pop %v679
    %681 = vmatpush.msra.mxu0 0.0
    %682 = vmatpush.msra.mxu0 0.0
    %683 = vmatpush.msra.mxu0 0.0
    %684 = vmatpush.msra.mxu0 0.0
    %685 = vmatpush.msra.mxu0 0.0
    %686 = vmatpush.msra.mxu0 0.0
    %687 = vmatpush.msra.mxu0 0.0
    %688 = vmatpush.msra.mxu0 0.0
    %689 = vmatpush.msra.mxu0 0.0
    %690 = vmatpush.msra.mxu0 0.0
    %691 = vmatpush.msra.mxu0 0.0
    %692 = vmatpush.msra.mxu0 0.0
    %693 = vmatpush.msra.mxu0 %v97
    %694 = vmatpush.msra.mxu0 %v96
    %695 = vmatpush.msra.mxu0 %v95
    %696 = vmatpush.msra.mxu0 %v94
    %697 = vmatmul.f32.gmra.mxu0 %v577
    %v698 = vpop.f32.mrf.mxu0
    %v699 = vadd.f32 0.0, %v698
    %700 = vdwg.mxu0
    %v701 = vadd.f32 %v575, %v699
    %v702 = vxor.u32 %v701, 2147483648
    %v703 = vmul.f32 %v702, 1.442695
    %v704 = vpow.pop %v703
    %v705 = vadd.f32 %v704, 1.0
    %v706 = vrcp.pop %v705
    %v707 = vmul.f32 %v705, %v706
    %v708 = vsub.f32 1.0, %v707
    %v709 = vmul.f32 %v706, %v708
    %v710 = vadd.f32 %v706, %v709
    %vm711 = vweird.f32 %v705
    %vm712 = vweird.f32 %v706
    %vm713 = vmor %vm711, %vm712
    %v714 = vsel %vm713, %v706, %v710
    %v715 = vand.u32 2147483647, %v705
    %vm716 = vcmp.eq.f32.partialorder %v715, 8.507059e+37
    %v717 = vand.u32 %v705, 2147483648
    %v718 = vor.u32 1.1754944e-38, %v717
    %v719 = vsel %vm716, %v718, %v714
    %v720 = vmul.f32 1.0, %v719
    %v721 = vmul.f32 %v658, %v566
    %v722 = vmul.f32 %v618, %v680
    %v723 = vadd.f32 %v721, %v722
    %v724 = vtanh.pop %v723
    %v725 = vmul.f32 %v720, %v724
    %s726 = scalar_lea.vmem [#allocation4], 6
    %727 = vst.msk [vmem:[%s726] sm:$0x3] %vm255, %v725
    %s728 = scalar_lea.vmem [#allocation6], 32
    %v729 = vld [vmem:[%s728] sm:$0x3]
    %v730 = vld [vmem:[%s728 + $0x2] sm:$0x3]
    %v731 = vld [vmem:[%s728 + $0x4] sm:$0x3]
    %v732 = vld [vmem:[%s728 + $0x6] sm:$0x3]
    %v734 = vsel %vm104, %v725, 0
    %736 = vmatpush.msra.mxu0 0.0
    %737 = vmatpush.msra.mxu0 0.0
    %738 = vmatpush.msra.mxu0 0.0
    %739 = vmatpush.msra.mxu0 0.0
    %740 = vmatpush.msra.mxu0 0.0
    %741 = vmatpush.msra.mxu0 0.0
    %742 = vmatpush.msra.mxu0 0.0
    %743 = vmatpush.msra.mxu0 0.0
    %744 = vmatpush.msra.mxu0 0.0
    %745 = vmatpush.msra.mxu0 0.0
    %746 = vmatpush.msra.mxu0 0.0
    %747 = vmatpush.msra.mxu0 0.0
    %748 = vmatpush.msra.mxu0 %v82
    %749 = vmatpush.msra.mxu0 %v81
    %750 = vmatpush.msra.mxu0 %v80
    %751 = vmatpush.msra.mxu0 %v79
    %752 = vmatmul.f32.gmra.mxu0 %v734
    %v753 = vpop.f32.mrf.mxu0
    %v754 = vadd.f32 0.0, %v753
    %755 = vdwg.mxu0
    %v756 = vadd.f32 %v729, %v754
    %v757 = vxor.u32 %v756, 2147483648
    %v758 = vmul.f32 %v757, 1.442695
    %v759 = vpow.pop %v758
    %v760 = vadd.f32 %v759, 1.0
    %v761 = vrcp.pop %v760
    %v762 = vmul.f32 %v760, %v761
    %v763 = vsub.f32 1.0, %v762
    %v764 = vmul.f32 %v761, %v763
    %v765 = vadd.f32 %v761, %v764
    %vm766 = vweird.f32 %v760
    %vm767 = vweird.f32 %v761
    %vm768 = vmor %vm766, %vm767
    %v769 = vsel %vm768, %v761, %v765
    %v770 = vand.u32 2147483647, %v760
    %vm771 = vcmp.eq.f32.partialorder %v770, 8.507059e+37
    %v772 = vand.u32 %v760, 2147483648
    %v773 = vor.u32 1.1754944e-38, %v772
    %v774 = vsel %vm771, %v773, %v769
    %v775 = vmul.f32 1.0, %v774
    %776 = vmatpush.msra.mxu0 0.0
    %777 = vmatpush.msra.mxu0 0.0
    %778 = vmatpush.msra.mxu0 0.0
    %779 = vmatpush.msra.mxu0 0.0
    %780 = vmatpush.msra.mxu0 0.0
    %781 = vmatpush.msra.mxu0 0.0
    %782 = vmatpush.msra.mxu0 0.0
    %783 = vmatpush.msra.mxu0 0.0
    %784 = vmatpush.msra.mxu0 0.0
    %785 = vmatpush.msra.mxu0 0.0
    %786 = vmatpush.msra.mxu0 0.0
    %787 = vmatpush.msra.mxu0 0.0
    %788 = vmatpush.msra.mxu0 %v87
    %789 = vmatpush.msra.mxu0 %v86
    %790 = vmatpush.msra.mxu0 %v85
    %791 = vmatpush.msra.mxu0 %v84
    %792 = vmatmul.f32.gmra.mxu0 %v734
    %v793 = vpop.f32.mrf.mxu0
    %v794 = vadd.f32 0.0, %v793
    %795 = vdwg.mxu0
    %v796 = vadd.f32 %v730, %v794
    %v797 = vxor.u32 %v796, 2147483648
    %v798 = vmul.f32 %v797, 1.442695
    %v799 = vpow.pop %v798
    %v800 = vadd.f32 %v799, 1.0
    %v801 = vrcp.pop %v800
    %v802 = vmul.f32 %v800, %v801
    %v803 = vsub.f32 1.0, %v802
    %v804 = vmul.f32 %v801, %v803
    %v805 = vadd.f32 %v801, %v804
    %vm806 = vweird.f32 %v800
    %vm807 = vweird.f32 %v801
    %vm808 = vmor %vm806, %vm807
    %v809 = vsel %vm808, %v801, %v805
    %v810 = vand.u32 2147483647, %v800
    %vm811 = vcmp.eq.f32.partialorder %v810, 8.507059e+37
    %v812 = vand.u32 %v800, 2147483648
    %v813 = vor.u32 1.1754944e-38, %v812
    %v814 = vsel %vm811, %v813, %v809
    %v815 = vmul.f32 1.0, %v814
    %816 = vmatpush.msra.mxu0 0.0
    %817 = vmatpush.msra.mxu0 0.0
    %818 = vmatpush.msra.mxu0 0.0
    %819 = vmatpush.msra.mxu0 0.0
    %820 = vmatpush.msra.mxu0 0.0
    %821 = vmatpush.msra.mxu0 0.0
    %822 = vmatpush.msra.mxu0 0.0
    %823 = vmatpush.msra.mxu0 0.0
    %824 = vmatpush.msra.mxu0 0.0
    %825 = vmatpush.msra.mxu0 0.0
    %826 = vmatpush.msra.mxu0 0.0
    %827 = vmatpush.msra.mxu0 0.0
    %828 = vmatpush.msra.mxu0 %v92
    %829 = vmatpush.msra.mxu0 %v91
    %830 = vmatpush.msra.mxu0 %v90
    %831 = vmatpush.msra.mxu0 %v89
    %832 = vmatmul.f32.gmra.mxu0 %v734
    %v833 = vpop.f32.mrf.mxu0
    %v834 = vadd.f32 0.0, %v833
    %835 = vdwg.mxu0
    %v836 = vadd.f32 %v731, %v834
    %v837 = vtanh.pop %v836
    %838 = vmatpush.msra.mxu0 0.0
    %839 = vmatpush.msra.mxu0 0.0
    %840 = vmatpush.msra.mxu0 0.0
    %841 = vmatpush.msra.mxu0 0.0
    %842 = vmatpush.msra.mxu0 0.0
    %843 = vmatpush.msra.mxu0 0.0
    %844 = vmatpush.msra.mxu0 0.0
    %845 = vmatpush.msra.mxu0 0.0
    %846 = vmatpush.msra.mxu0 0.0
    %847 = vmatpush.msra.mxu0 0.0
    %848 = vmatpush.msra.mxu0 0.0
    %849 = vmatpush.msra.mxu0 0.0
    %850 = vmatpush.msra.mxu0 %v97
    %851 = vmatpush.msra.mxu0 %v96
    %852 = vmatpush.msra.mxu0 %v95
    %853 = vmatpush.msra.mxu0 %v94
    %854 = vmatmul.f32.gmra.mxu0 %v734
    %v855 = vpop.f32.mrf.mxu0
    %v856 = vadd.f32 0.0, %v855
    %857 = vdwg.mxu0
    %v858 = vadd.f32 %v732, %v856
    %v859 = vxor.u32 %v858, 2147483648
    %v860 = vmul.f32 %v859, 1.442695
    %v861 = vpow.pop %v860
    %v862 = vadd.f32 %v861, 1.0
    %v863 = vrcp.pop %v862
    %v864 = vmul.f32 %v862, %v863
    %v865 = vsub.f32 1.0, %v864
    %v866 = vmul.f32 %v863, %v865
    %v867 = vadd.f32 %v863, %v866
    %vm868 = vweird.f32 %v862
    %vm869 = vweird.f32 %v863
    %vm870 = vmor %vm868, %vm869
    %v871 = vsel %vm870, %v863, %v867
    %v872 = vand.u32 2147483647, %v862
    %vm873 = vcmp.eq.f32.partialorder %v872, 8.507059e+37
    %v874 = vand.u32 %v862, 2147483648
    %v875 = vor.u32 1.1754944e-38, %v874
    %v876 = vsel %vm873, %v875, %v871
    %v877 = vmul.f32 1.0, %v876
    %v878 = vmul.f32 %v815, %v723
    %v879 = vmul.f32 %v775, %v837
    %v880 = vadd.f32 %v878, %v879
    %v881 = vtanh.pop %v880
    %v882 = vmul.f32 %v877, %v881
    %s883 = scalar_lea.vmem [#allocation4], 8
    %884 = vst.msk [vmem:[%s883] sm:$0x3] %vm255, %v882
    %s885 = scalar_lea.vmem [#allocation6], 40
    %v886 = vld [vmem:[%s885] sm:$0x3]
    %v887 = vld [vmem:[%s885 + $0x2] sm:$0x3]
    %v888 = vld [vmem:[%s885 + $0x4] sm:$0x3]
    %v889 = vld [vmem:[%s885 + $0x6] sm:$0x3]
    %v891 = vsel %vm104, %v882, 0
    %893 = vmatpush.msra.mxu0 0.0
    %894 = vmatpush.msra.mxu0 0.0
    %895 = vmatpush.msra.mxu0 0.0
    %896 = vmatpush.msra.mxu0 0.0
    %897 = vmatpush.msra.mxu0 0.0
    %898 = vmatpush.msra.mxu0 0.0
    %899 = vmatpush.msra.mxu0 0.0
    %900 = vmatpush.msra.mxu0 0.0
    %901 = vmatpush.msra.mxu0 0.0
    %902 = vmatpush.msra.mxu0 0.0
    %903 = vmatpush.msra.mxu0 0.0
    %904 = vmatpush.msra.mxu0 0.0
    %905 = vmatpush.msra.mxu0 %v82
    %906 = vmatpush.msra.mxu0 %v81
    %907 = vmatpush.msra.mxu0 %v80
    %908 = vmatpush.msra.mxu0 %v79
    %909 = vmatmul.f32.gmra.mxu0 %v891
    %v910 = vpop.f32.mrf.mxu0
    %v911 = vadd.f32 0.0, %v910
    %912 = vdwg.mxu0
    %v913 = vadd.f32 %v886, %v911
    %v914 = vxor.u32 %v913, 2147483648
    %v915 = vmul.f32 %v914, 1.442695
    %v916 = vpow.pop %v915
    %v917 = vadd.f32 %v916, 1.0
    %v918 = vrcp.pop %v917
    %v919 = vmul.f32 %v917, %v918
    %v920 = vsub.f32 1.0, %v919
    %v921 = vmul.f32 %v918, %v920
    %v922 = vadd.f32 %v918, %v921
    %vm923 = vweird.f32 %v917
    %vm924 = vweird.f32 %v918
    %vm925 = vmor %vm923, %vm924
    %v926 = vsel %vm925, %v918, %v922
    %v927 = vand.u32 2147483647, %v917
    %vm928 = vcmp.eq.f32.partialorder %v927, 8.507059e+37
    %v929 = vand.u32 %v917, 2147483648
    %v930 = vor.u32 1.1754944e-38, %v929
    %v931 = vsel %vm928, %v930, %v926
    %v932 = vmul.f32 1.0, %v931
    %933 = vmatpush.msra.mxu0 0.0
    %934 = vmatpush.msra.mxu0 0.0
    %935 = vmatpush.msra.mxu0 0.0
    %936 = vmatpush.msra.mxu0 0.0
    %937 = vmatpush.msra.mxu0 0.0
    %938 = vmatpush.msra.mxu0 0.0
    %939 = vmatpush.msra.mxu0 0.0
    %940 = vmatpush.msra.mxu0 0.0
    %941 = vmatpush.msra.mxu0 0.0
    %942 = vmatpush.msra.mxu0 0.0
    %943 = vmatpush.msra.mxu0 0.0
    %944 = vmatpush.msra.mxu0 0.0
    %945 = vmatpush.msra.mxu0 %v87
    %946 = vmatpush.msra.mxu0 %v86
    %947 = vmatpush.msra.mxu0 %v85
    %948 = vmatpush.msra.mxu0 %v84
    %949 = vmatmul.f32.gmra.mxu0 %v891
    %v950 = vpop.f32.mrf.mxu0
    %v951 = vadd.f32 0.0, %v950
    %952 = vdwg.mxu0
    %v953 = vadd.f32 %v887, %v951
    %v954 = vxor.u32 %v953, 2147483648
    %v955 = vmul.f32 %v954, 1.442695
    %v956 = vpow.pop %v955
    %v957 = vadd.f32 %v956, 1.0
    %v958 = vrcp.pop %v957
    %v959 = vmul.f32 %v957, %v958
    %v960 = vsub.f32 1.0, %v959
    %v961 = vmul.f32 %v958, %v960
    %v962 = vadd.f32 %v958, %v961
    %vm963 = vweird.f32 %v957
    %vm964 = vweird.f32 %v958
    %vm965 = vmor %vm963, %vm964
    %v966 = vsel %vm965, %v958, %v962
    %v967 = vand.u32 2147483647, %v957
    %vm968 = vcmp.eq.f32.partialorder %v967, 8.507059e+37
    %v969 = vand.u32 %v957, 2147483648
    %v970 = vor.u32 1.1754944e-38, %v969
    %v971 = vsel %vm968, %v970, %v966
    %v972 = vmul.f32 1.0, %v971
    %973 = vmatpush.msra.mxu0 0.0
    %974 = vmatpush.msra.mxu0 0.0
    %975 = vmatpush.msra.mxu0 0.0
    %976 = vmatpush.msra.mxu0 0.0
    %977 = vmatpush.msra.mxu0 0.0
    %978 = vmatpush.msra.mxu0 0.0
    %979 = vmatpush.msra.mxu0 0.0
    %980 = vmatpush.msra.mxu0 0.0
    %981 = vmatpush.msra.mxu0 0.0
    %982 = vmatpush.msra.mxu0 0.0
    %983 = vmatpush.msra.mxu0 0.0
    %984 = vmatpush.msra.mxu0 0.0
    %985 = vmatpush.msra.mxu0 %v92
    %986 = vmatpush.msra.mxu0 %v91
    %987 = vmatpush.msra.mxu0 %v90
    %988 = vmatpush.msra.mxu0 %v89
    %989 = vmatmul.f32.gmra.mxu0 %v891
    %v990 = vpop.f32.mrf.mxu0
    %v991 = vadd.f32 0.0, %v990
    %992 = vdwg.mxu0
    %v993 = vadd.f32 %v888, %v991
    %v994 = vtanh.pop %v993
    %995 = vmatpush.msra.mxu0 0.0
    %996 = vmatpush.msra.mxu0 0.0
    %997 = vmatpush.msra.mxu0 0.0
    %998 = vmatpush.msra.mxu0 0.0
    %999 = vmatpush.msra.mxu0 0.0
    %1000 = vmatpush.msra.mxu0 0.0
    %1001 = vmatpush.msra.mxu0 0.0
    %1002 = vmatpush.msra.mxu0 0.0
    %1003 = vmatpush.msra.mxu0 0.0
    %1004 = vmatpush.msra.mxu0 0.0
    %1005 = vmatpush.msra.mxu0 0.0
    %1006 = vmatpush.msra.mxu0 0.0
    %1007 = vmatpush.msra.mxu0 %v97
    %1008 = vmatpush.msra.mxu0 %v96
    %1009 = vmatpush.msra.mxu0 %v95
    %1010 = vmatpush.msra.mxu0 %v94
    %1011 = vmatmul.f32.gmra.mxu0 %v891
    %v1012 = vpop.f32.mrf.mxu0
    %v1013 = vadd.f32 0.0, %v1012
    %1014 = vdwg.mxu0
    %v1015 = vadd.f32 %v889, %v1013
    %v1016 = vxor.u32 %v1015, 2147483648
    %v1017 = vmul.f32 %v1016, 1.442695
    %v1018 = vpow.pop %v1017
    %v1019 = vadd.f32 %v1018, 1.0
    %v1020 = vrcp.pop %v1019
    %v1021 = vmul.f32 %v1019, %v1020
    %v1022 = vsub.f32 1.0, %v1021
    %v1023 = vmul.f32 %v1020, %v1022
    %v1024 = vadd.f32 %v1020, %v1023
    %vm1025 = vweird.f32 %v1019
    %vm1026 = vweird.f32 %v1020
    %vm1027 = vmor %vm1025, %vm1026
    %v1028 = vsel %vm1027, %v1020, %v1024
    %v1029 = vand.u32 2147483647, %v1019
    %vm1030 = vcmp.eq.f32.partialorder %v1029, 8.507059e+37
    %v1031 = vand.u32 %v1019, 2147483648
    %v1032 = vor.u32 1.1754944e-38, %v1031
    %v1033 = vsel %vm1030, %v1032, %v1028
    %v1034 = vmul.f32 1.0, %v1033
    %v1035 = vmul.f32 %v972, %v880
    %v1036 = vmul.f32 %v932, %v994
    %v1037 = vadd.f32 %v1035, %v1036
    %v1038 = vtanh.pop %v1037
    %v1039 = vmul.f32 %v1034, %v1038
    %s1040 = scalar_lea.vmem [#allocation4], 10
    %1041 = vst.msk [vmem:[%s1040] sm:$0x3] %vm255, %v1039
    %s1042 = scalar_lea.vmem [#allocation6], 48
    %v1043 = vld [vmem:[%s1042] sm:$0x3]
    %v1044 = vld [vmem:[%s1042 + $0x2] sm:$0x3]
    %v1045 = vld [vmem:[%s1042 + $0x4] sm:$0x3]
    %v1046 = vld [vmem:[%s1042 + $0x6] sm:$0x3]
    %v1048 = vsel %vm104, %v1039, 0
    %1050 = vmatpush.msra.mxu0 0.0
    %1051 = vmatpush.msra.mxu0 0.0
    %1052 = vmatpush.msra.mxu0 0.0
    %1053 = vmatpush.msra.mxu0 0.0
    %1054 = vmatpush.msra.mxu0 0.0
    %1055 = vmatpush.msra.mxu0 0.0
    %1056 = vmatpush.msra.mxu0 0.0
    %1057 = vmatpush.msra.mxu0 0.0
    %1058 = vmatpush.msra.mxu0 0.0
    %1059 = vmatpush.msra.mxu0 0.0
    %1060 = vmatpush.msra.mxu0 0.0
    %1061 = vmatpush.msra.mxu0 0.0
    %1062 = vmatpush.msra.mxu0 %v82
    %1063 = vmatpush.msra.mxu0 %v81
    %1064 = vmatpush.msra.mxu0 %v80
    %1065 = vmatpush.msra.mxu0 %v79
    %1066 = vmatmul.f32.gmra.mxu0 %v1048
    %v1067 = vpop.f32.mrf.mxu0
    %v1068 = vadd.f32 0.0, %v1067
    %1069 = vdwg.mxu0
    %v1070 = vadd.f32 %v1043, %v1068
    %v1071 = vxor.u32 %v1070, 2147483648
    %v1072 = vmul.f32 %v1071, 1.442695
    %v1073 = vpow.pop %v1072
    %v1074 = vadd.f32 %v1073, 1.0
    %v1075 = vrcp.pop %v1074
    %v1076 = vmul.f32 %v1074, %v1075
    %v1077 = vsub.f32 1.0, %v1076
    %v1078 = vmul.f32 %v1075, %v1077
    %v1079 = vadd.f32 %v1075, %v1078
    %vm1080 = vweird.f32 %v1074
    %vm1081 = vweird.f32 %v1075
    %vm1082 = vmor %vm1080, %vm1081
    %v1083 = vsel %vm1082, %v1075, %v1079
    %v1084 = vand.u32 2147483647, %v1074
    %vm1085 = vcmp.eq.f32.partialorder %v1084, 8.507059e+37
    %v1086 = vand.u32 %v1074, 2147483648
    %v1087 = vor.u32 1.1754944e-38, %v1086
    %v1088 = vsel %vm1085, %v1087, %v1083
    %v1089 = vmul.f32 1.0, %v1088
    %1090 = vmatpush.msra.mxu0 0.0
    %1091 = vmatpush.msra.mxu0 0.0
    %1092 = vmatpush.msra.mxu0 0.0
    %1093 = vmatpush.msra.mxu0 0.0
    %1094 = vmatpush.msra.mxu0 0.0
    %1095 = vmatpush.msra.mxu0 0.0
    %1096 = vmatpush.msra.mxu0 0.0
    %1097 = vmatpush.msra.mxu0 0.0
    %1098 = vmatpush.msra.mxu0 0.0
    %1099 = vmatpush.msra.mxu0 0.0
    %1100 = vmatpush.msra.mxu0 0.0
    %1101 = vmatpush.msra.mxu0 0.0
    %1102 = vmatpush.msra.mxu0 %v87
    %1103 = vmatpush.msra.mxu0 %v86
    %1104 = vmatpush.msra.mxu0 %v85
    %1105 = vmatpush.msra.mxu0 %v84
    %1106 = vmatmul.f32.gmra.mxu0 %v1048
    %v1107 = vpop.f32.mrf.mxu0
    %v1108 = vadd.f32 0.0, %v1107
    %1109 = vdwg.mxu0
    %v1110 = vadd.f32 %v1044, %v1108
    %v1111 = vxor.u32 %v1110, 2147483648
    %v1112 = vmul.f32 %v1111, 1.442695
    %v1113 = vpow.pop %v1112
    %v1114 = vadd.f32 %v1113, 1.0
    %v1115 = vrcp.pop %v1114
    %v1116 = vmul.f32 %v1114, %v1115
    %v1117 = vsub.f32 1.0, %v1116
    %v1118 = vmul.f32 %v1115, %v1117
    %v1119 = vadd.f32 %v1115, %v1118
    %vm1120 = vweird.f32 %v1114
    %vm1121 = vweird.f32 %v1115
    %vm1122 = vmor %vm1120, %vm1121
    %v1123 = vsel %vm1122, %v1115, %v1119
    %v1124 = vand.u32 2147483647, %v1114
    %vm1125 = vcmp.eq.f32.partialorder %v1124, 8.507059e+37
    %v1126 = vand.u32 %v1114, 2147483648
    %v1127 = vor.u32 1.1754944e-38, %v1126
    %v1128 = vsel %vm1125, %v1127, %v1123
    %v1129 = vmul.f32 1.0, %v1128
    %1130 = vmatpush.msra.mxu0 0.0
    %1131 = vmatpush.msra.mxu0 0.0
    %1132 = vmatpush.msra.mxu0 0.0
    %1133 = vmatpush.msra.mxu0 0.0
    %1134 = vmatpush.msra.mxu0 0.0
    %1135 = vmatpush.msra.mxu0 0.0
    %1136 = vmatpush.msra.mxu0 0.0
    %1137 = vmatpush.msra.mxu0 0.0
    %1138 = vmatpush.msra.mxu0 0.0
    %1139 = vmatpush.msra.mxu0 0.0
    %1140 = vmatpush.msra.mxu0 0.0
    %1141 = vmatpush.msra.mxu0 0.0
    %1142 = vmatpush.msra.mxu0 %v92
    %1143 = vmatpush.msra.mxu0 %v91
    %1144 = vmatpush.msra.mxu0 %v90
    %1145 = vmatpush.msra.mxu0 %v89
    %1146 = vmatmul.f32.gmra.mxu0 %v1048
    %v1147 = vpop.f32.mrf.mxu0
    %v1148 = vadd.f32 0.0, %v1147
    %1149 = vdwg.mxu0
    %v1150 = vadd.f32 %v1045, %v1148
    %v1151 = vtanh.pop %v1150
    %1152 = vmatpush.msra.mxu0 0.0
    %1153 = vmatpush.msra.mxu0 0.0
    %1154 = vmatpush.msra.mxu0 0.0
    %1155 = vmatpush.msra.mxu0 0.0
    %1156 = vmatpush.msra.mxu0 0.0
    %1157 = vmatpush.msra.mxu0 0.0
    %1158 = vmatpush.msra.mxu0 0.0
    %1159 = vmatpush.msra.mxu0 0.0
    %1160 = vmatpush.msra.mxu0 0.0
    %1161 = vmatpush.msra.mxu0 0.0
    %1162 = vmatpush.msra.mxu0 0.0
    %1163 = vmatpush.msra.mxu0 0.0
    %1164 = vmatpush.msra.mxu0 %v97
    %1165 = vmatpush.msra.mxu0 %v96
    %1166 = vmatpush.msra.mxu0 %v95
    %1167 = vmatpush.msra.mxu0 %v94
    %1168 = vmatmul.f32.gmra.mxu0 %v1048
    %v1169 = vpop.f32.mrf.mxu0
    %v1170 = vadd.f32 0.0, %v1169
    %1171 = vdwg.mxu0
    %v1172 = vadd.f32 %v1046, %v1170
    %v1173 = vxor.u32 %v1172, 2147483648
    %v1174 = vmul.f32 %v1173, 1.442695
    %v1175 = vpow.pop %v1174
    %v1176 = vadd.f32 %v1175, 1.0
    %v1177 = vrcp.pop %v1176
    %v1178 = vmul.f32 %v1176, %v1177
    %v1179 = vsub.f32 1.0, %v1178
    %v1180 = vmul.f32 %v1177, %v1179
    %v1181 = vadd.f32 %v1177, %v1180
    %vm1182 = vweird.f32 %v1176
    %vm1183 = vweird.f32 %v1177
    %vm1184 = vmor %vm1182, %vm1183
    %v1185 = vsel %vm1184, %v1177, %v1181
    %v1186 = vand.u32 2147483647, %v1176
    %vm1187 = vcmp.eq.f32.partialorder %v1186, 8.507059e+37
    %v1188 = vand.u32 %v1176, 2147483648
    %v1189 = vor.u32 1.1754944e-38, %v1188
    %v1190 = vsel %vm1187, %v1189, %v1185
    %v1191 = vmul.f32 1.0, %v1190
    %v1192 = vmul.f32 %v1129, %v1037
    %v1193 = vmul.f32 %v1089, %v1151
    %v1194 = vadd.f32 %v1192, %v1193
    %v1195 = vtanh.pop %v1194
    %v1196 = vmul.f32 %v1191, %v1195
    %s1197 = scalar_lea.vmem [#allocation4], 12
    %1198 = vst.msk [vmem:[%s1197] sm:$0x3] %vm255, %v1196
    %s1199 = scalar_lea.vmem [#allocation6], 56
    %v1200 = vld [vmem:[%s1199] sm:$0x3]
    %v1201 = vld [vmem:[%s1199 + $0x2] sm:$0x3]
    %v1202 = vld [vmem:[%s1199 + $0x4] sm:$0x3]
    %v1203 = vld [vmem:[%s1199 + $0x6] sm:$0x3]
    %v1205 = vsel %vm104, %v1196, 0
    %1207 = vmatpush.msra.mxu0 0.0
    %1208 = vmatpush.msra.mxu0 0.0
    %1209 = vmatpush.msra.mxu0 0.0
    %1210 = vmatpush.msra.mxu0 0.0
    %1211 = vmatpush.msra.mxu0 0.0
    %1212 = vmatpush.msra.mxu0 0.0
    %1213 = vmatpush.msra.mxu0 0.0
    %1214 = vmatpush.msra.mxu0 0.0
    %1215 = vmatpush.msra.mxu0 0.0
    %1216 = vmatpush.msra.mxu0 0.0
    %1217 = vmatpush.msra.mxu0 0.0
    %1218 = vmatpush.msra.mxu0 0.0
    %1219 = vmatpush.msra.mxu0 %v82
    %1220 = vmatpush.msra.mxu0 %v81
    %1221 = vmatpush.msra.mxu0 %v80
    %1222 = vmatpush.msra.mxu0 %v79
    %1223 = vmatmul.f32.gmra.mxu0 %v1205
    %v1224 = vpop.f32.mrf.mxu0
    %v1225 = vadd.f32 0.0, %v1224
    %1226 = vdwg.mxu0
    %v1227 = vadd.f32 %v1200, %v1225
    %v1228 = vxor.u32 %v1227, 2147483648
    %v1229 = vmul.f32 %v1228, 1.442695
    %v1230 = vpow.pop %v1229
    %v1231 = vadd.f32 %v1230, 1.0
    %v1232 = vrcp.pop %v1231
    %v1233 = vmul.f32 %v1231, %v1232
    %v1234 = vsub.f32 1.0, %v1233
    %v1235 = vmul.f32 %v1232, %v1234
    %v1236 = vadd.f32 %v1232, %v1235
    %vm1237 = vweird.f32 %v1231
    %vm1238 = vweird.f32 %v1232
    %vm1239 = vmor %vm1237, %vm1238
    %v1240 = vsel %vm1239, %v1232, %v1236
    %v1241 = vand.u32 2147483647, %v1231
    %vm1242 = vcmp.eq.f32.partialorder %v1241, 8.507059e+37
    %v1243 = vand.u32 %v1231, 2147483648
    %v1244 = vor.u32 1.1754944e-38, %v1243
    %v1245 = vsel %vm1242, %v1244, %v1240
    %v1246 = vmul.f32 1.0, %v1245
    %1247 = vmatpush.msra.mxu0 0.0
    %1248 = vmatpush.msra.mxu0 0.0
    %1249 = vmatpush.msra.mxu0 0.0
    %1250 = vmatpush.msra.mxu0 0.0
    %1251 = vmatpush.msra.mxu0 0.0
    %1252 = vmatpush.msra.mxu0 0.0
    %1253 = vmatpush.msra.mxu0 0.0
    %1254 = vmatpush.msra.mxu0 0.0
    %1255 = vmatpush.msra.mxu0 0.0
    %1256 = vmatpush.msra.mxu0 0.0
    %1257 = vmatpush.msra.mxu0 0.0
    %1258 = vmatpush.msra.mxu0 0.0
    %1259 = vmatpush.msra.mxu0 %v87
    %1260 = vmatpush.msra.mxu0 %v86
    %1261 = vmatpush.msra.mxu0 %v85
    %1262 = vmatpush.msra.mxu0 %v84
    %1263 = vmatmul.f32.gmra.mxu0 %v1205
    %v1264 = vpop.f32.mrf.mxu0
    %v1265 = vadd.f32 0.0, %v1264
    %1266 = vdwg.mxu0
    %v1267 = vadd.f32 %v1201, %v1265
    %v1268 = vxor.u32 %v1267, 2147483648
    %v1269 = vmul.f32 %v1268, 1.442695
    %v1270 = vpow.pop %v1269
    %v1271 = vadd.f32 %v1270, 1.0
    %v1272 = vrcp.pop %v1271
    %v1273 = vmul.f32 %v1271, %v1272
    %v1274 = vsub.f32 1.0, %v1273
    %v1275 = vmul.f32 %v1272, %v1274
    %v1276 = vadd.f32 %v1272, %v1275
    %vm1277 = vweird.f32 %v1271
    %vm1278 = vweird.f32 %v1272
    %vm1279 = vmor %vm1277, %vm1278
    %v1280 = vsel %vm1279, %v1272, %v1276
    %v1281 = vand.u32 2147483647, %v1271
    %vm1282 = vcmp.eq.f32.partialorder %v1281, 8.507059e+37
    %v1283 = vand.u32 %v1271, 2147483648
    %v1284 = vor.u32 1.1754944e-38, %v1283
    %v1285 = vsel %vm1282, %v1284, %v1280
    %v1286 = vmul.f32 1.0, %v1285
    %1287 = vmatpush.msra.mxu0 0.0
    %1288 = vmatpush.msra.mxu0 0.0
    %1289 = vmatpush.msra.mxu0 0.0
    %1290 = vmatpush.msra.mxu0 0.0
    %1291 = vmatpush.msra.mxu0 0.0
    %1292 = vmatpush.msra.mxu0 0.0
    %1293 = vmatpush.msra.mxu0 0.0
    %1294 = vmatpush.msra.mxu0 0.0
    %1295 = vmatpush.msra.mxu0 0.0
    %1296 = vmatpush.msra.mxu0 0.0
    %1297 = vmatpush.msra.mxu0 0.0
    %1298 = vmatpush.msra.mxu0 0.0
    %1299 = vmatpush.msra.mxu0 %v92
    %1300 = vmatpush.msra.mxu0 %v91
    %1301 = vmatpush.msra.mxu0 %v90
    %1302 = vmatpush.msra.mxu0 %v89
    %1303 = vmatmul.f32.gmra.mxu0 %v1205
    %v1304 = vpop.f32.mrf.mxu0
    %v1305 = vadd.f32 0.0, %v1304
    %1306 = vdwg.mxu0
    %v1307 = vadd.f32 %v1202, %v1305
    %v1308 = vtanh.pop %v1307
    %1309 = vmatpush.msra.mxu0 0.0
    %1310 = vmatpush.msra.mxu0 0.0
    %1311 = vmatpush.msra.mxu0 0.0
    %1312 = vmatpush.msra.mxu0 0.0
    %1313 = vmatpush.msra.mxu0 0.0
    %1314 = vmatpush.msra.mxu0 0.0
    %1315 = vmatpush.msra.mxu0 0.0
    %1316 = vmatpush.msra.mxu0 0.0
    %1317 = vmatpush.msra.mxu0 0.0
    %1318 = vmatpush.msra.mxu0 0.0
    %1319 = vmatpush.msra.mxu0 0.0
    %1320 = vmatpush.msra.mxu0 0.0
    %1321 = vmatpush.msra.mxu0 %v97
    %1322 = vmatpush.msra.mxu0 %v96
    %1323 = vmatpush.msra.mxu0 %v95
    %1324 = vmatpush.msra.mxu0 %v94
    %1325 = vmatmul.f32.gmra.mxu0 %v1205
    %v1326 = vpop.f32.mrf.mxu0
    %v1327 = vadd.f32 0.0, %v1326
    %1328 = vdwg.mxu0
    %v1329 = vadd.f32 %v1203, %v1327
    %v1330 = vxor.u32 %v1329, 2147483648
    %v1331 = vmul.f32 %v1330, 1.442695
    %v1332 = vpow.pop %v1331
    %v1333 = vadd.f32 %v1332, 1.0
    %v1334 = vrcp.pop %v1333
    %v1335 = vmul.f32 %v1333, %v1334
    %v1336 = vsub.f32 1.0, %v1335
    %v1337 = vmul.f32 %v1334, %v1336
    %v1338 = vadd.f32 %v1334, %v1337
    %vm1339 = vweird.f32 %v1333
    %vm1340 = vweird.f32 %v1334
    %vm1341 = vmor %vm1339, %vm1340
    %v1342 = vsel %vm1341, %v1334, %v1338
    %v1343 = vand.u32 2147483647, %v1333
    %vm1344 = vcmp.eq.f32.partialorder %v1343, 8.507059e+37
    %v1345 = vand.u32 %v1333, 2147483648
    %v1346 = vor.u32 1.1754944e-38, %v1345
    %v1347 = vsel %vm1344, %v1346, %v1342
    %v1348 = vmul.f32 1.0, %v1347
    %v1349 = vmul.f32 %v1286, %v1194
    %v1350 = vmul.f32 %v1246, %v1308
    %v1351 = vadd.f32 %v1349, %v1350
    %v1352 = vtanh.pop %v1351
    %v1353 = vmul.f32 %v1348, %v1352
    %s1354 = scalar_lea.vmem [#allocation4], 14
    %1355 = vst.msk [vmem:[%s1354] sm:$0x3] %vm255, %v1353
    %1356 = vst.msk [vmem:[#allocation2] sm:$0x3] %vm255, %v1353
    %1357 = vst.msk [vmem:[#allocation3] sm:$0x3] %vm255, %v1351
    %v1358 = vld [vmem:[#allocation4] sm:$0x3]
    %v1359 = vld [vmem:[#allocation4 + $0x2] sm:$0x3]
    %v1360 = vld [vmem:[#allocation4 + $0x4] sm:$0x3]
    %v1361 = vld [vmem:[#allocation4 + $0x6] sm:$0x3]
    %v1362 = vld [vmem:[#allocation4 + $0x8] sm:$0x3]
    %v1363 = vld [vmem:[#allocation4 + $0xa] sm:$0x3]
    %v1364 = vld [vmem:[#allocation4 + $0xc] sm:$0x3]
    %v1365 = vld [vmem:[#allocation4 + $0xe] sm:$0x3]
    %v1366 = vld [vmem:[%s4] sm:$0x1]
    %v1368 = vperm.slane %v1366, 0
    %v1370 = vmul.f32 %v1358, %v1368
    %v1371 = vmul.f32 %v1359, %v1368
    %v1372 = vmul.f32 %v1360, %v1368
    %v1373 = vmul.f32 %v1361, %v1368
    %v1374 = vmul.f32 %v1362, %v1368
    %v1375 = vmul.f32 %v1363, %v1368
    %v1376 = vmul.f32 %v1364, %v1368
    %v1377 = vmul.f32 %v1365, %v1368
    %v1378 = vsel %vm255, %v1370, 0.0
    %1379 = vadd.xlane.f32.xlu0 %v1378
    %v1380 = vpop.xlane.xlu0 %1379
    %v1381 = vsel %vm255, %v1371, 0.0
    %1382 = vadd.xlane.f32.xlu0 %v1381
    %v1383 = vpop.xlane.xlu0 %1382
    %v1384 = vsel %vm255, %v1372, 0.0
    %1385 = vadd.xlane.f32.xlu0 %v1384
    %v1386 = vpop.xlane.xlu0 %1385
    %v1387 = vsel %vm255, %v1373, 0.0
    %1388 = vadd.xlane.f32.xlu0 %v1387
    %v1389 = vpop.xlane.xlu0 %1388
    %v1390 = vsel %vm255, %v1374, 0.0
    %1391 = vadd.xlane.f32.xlu0 %v1390
    %v1392 = vpop.xlane.xlu0 %1391
    %v1393 = vsel %vm255, %v1375, 0.0
    %1394 = vadd.xlane.f32.xlu0 %v1393
    %v1395 = vpop.xlane.xlu0 %1394
    %v1396 = vsel %vm255, %v1376, 0.0
    %1397 = vadd.xlane.f32.xlu0 %v1396
    %v1398 = vpop.xlane.xlu0 %1397
    %v1399 = vsel %vm255, %v1377, 0.0
    %1400 = vadd.xlane.f32.xlu0 %v1399
    %v1401 = vpop.xlane.xlu0 %1400
    %v1410 = vlaneseq
    %v1411 = vand.u32 %v1410, 127
    %v1412 = vperm.slane %v1380, %v1411
    %v1413 = vperm.slane %v1383, %v1411
    %v1414 = vperm.slane %v1386, %v1411
    %v1415 = vperm.slane %v1389, %v1411
    %v1416 = vperm.slane %v1392, %v1411
    %v1417 = vperm.slane %v1395, %v1411
    %v1418 = vperm.slane %v1398, %v1411
    %v1419 = vperm.slane %v1401, %v1411
    %vm1420 = vcmask 1041409
    %v1421 = vsel %vm1420, %v1413, %v1412
    %vm1422 = vcmask 1042434
    %v1423 = vsel %vm1422, %v1414, %v1421
    %vm1424 = vcmask 1043459
    %v1425 = vsel %vm1424, %v1415, %v1423
    %vm1426 = vcmask 1044484
    %v1427 = vsel %vm1426, %v1416, %v1425
    %vm1428 = vcmask 1045509
    %v1429 = vsel %vm1428, %v1417, %v1427
    %vm1430 = vcmask 1046534
    %v1431 = vsel %vm1430, %v1418, %v1429
    %vm1432 = vcmask 1047559
    %v1433 = vsel %vm1432, %v1419, %v1431
    %1435 = vxpose.xlu0.b32.start [1/16] %v1433, 128
    %1436 = vxpose.xlu0.b32.cont [2/16] 0.0, 128
    %1437 = vxpose.xlu0.b32.cont [3/16] 0.0, 128
    %1438 = vxpose.xlu0.b32.cont [4/16] 0.0, 128
    %1439 = vxpose.xlu0.b32.cont [5/16] 0.0, 128
    %1440 = vxpose.xlu0.b32.cont [6/16] 0.0, 128
    %1441 = vxpose.xlu0.b32.cont [7/16] 0.0, 128
    %1442 = vxpose.xlu0.b32.cont [8/16] 0.0, 128
    %1443 = vxpose.xlu0.b32.cont [9/16] 0.0, 128
    %1444 = vxpose.xlu0.b32.cont [10/16] 0.0, 128
    %1445 = vxpose.xlu0.b32.cont [11/16] 0.0, 128
    %1446 = vxpose.xlu0.b32.cont [12/16] 0.0, 128
    %1447 = vxpose.xlu0.b32.cont [13/16] 0.0, 128
    %1448 = vxpose.xlu0.b32.cont [14/16] 0.0, 128
    %1449 = vxpose.xlu0.b32.cont [15/16] 0.0, 128
    %1450 = vxpose.xlu0.b32.end [16/16] 0.0, 128
    %v1451 = vpop.trf.xlu0
    %v1452 = vpop.trf.xlu0
    %v1453 = vpop.trf.xlu0
    %v1454 = vpop.trf.xlu0
    %v1455 = vpop.trf.xlu0
    %v1456 = vpop.trf.xlu0
    %v1457 = vpop.trf.xlu0
    %v1458 = vpop.trf.xlu0
    %v1459 = vpop.trf.xlu0
    %v1460 = vpop.trf.xlu0
    %v1461 = vpop.trf.xlu0
    %v1462 = vpop.trf.xlu0
    %v1463 = vpop.trf.xlu0
    %v1464 = vpop.trf.xlu0
    %v1465 = vpop.trf.xlu0
    %v1466 = vpop.trf.xlu0
    %s1467 = sld [smem:[#allocation5]]
    %v1468 = vstv %s1467
    %v1469 = vadd.f32 %v1451, %v1468
    %v1470 = vxor.u32 %v1469, 2147483648
    %v1471 = vmul.f32 %v1470, 1.442695
    %v1472 = vpow.pop %v1471
    %v1473 = vadd.f32 %v1472, 1.0
    %v1474 = vrcp.pop %v1473
    %v1475 = vmul.f32 %v1473, %v1474
    %v1476 = vsub.f32 1.0, %v1475
    %v1477 = vmul.f32 %v1474, %v1476
    %v1478 = vadd.f32 %v1474, %v1477
    %vm1479 = vweird.f32 %v1473
    %vm1480 = vweird.f32 %v1474
    %vm1481 = vmor %vm1479, %vm1480
    %v1482 = vsel %vm1481, %v1474, %v1478
    %v1483 = vand.u32 2147483647, %v1473
    %vm1484 = vcmp.eq.f32.partialorder %v1483, 8.507059e+37
    %v1485 = vand.u32 %v1473, 2147483648
    %v1486 = vor.u32 1.1754944e-38, %v1485
    %v1487 = vsel %vm1484, %v1486, %v1482
    %v1488 = vmul.f32 1.0, %v1487
    %vm1489 = vcmask 58368
    %1490 = vst.msk [vmem:[#allocation12] sm:$0x3] %vm1489, %v1488
    // Predicated region
    $region42: #{tpu_custom_call.1} parent=1 // pred_check
      _
    $region43: #{tpu_custom_call.1} parent=1 // pred_check_branch
      %1492 = sbr.rel (0) target = $region45
    $region44: #{tpu_custom_call.1} parent=1 // pred_region
      %1494 = vsyncadd [#allocation8], 0
      %s1496 = sshll.u32 [#allocation12], 4
      %s1497 = int_to_ptr.vmem [resolvable:$true] %s1496
      %s1498 = sshll.u32 %s6, 4
      %s1499 = int_to_ptr.hbm [resolvable:$true] %s1498
      %1501 = dma.vmem_to_hbm [thread:$0]  %s1497, 32, %s1499, [#allocation8]
    $region45: #{tpu_custom_call.1} parent=1 // pred_fallthru
      _
    // Predicated region
    $region46: #{tpu_custom_call.1} parent=1 // pred_check
      _
    $region47: #{tpu_custom_call.1} parent=1 // pred_check_branch
      %1503 = sbr.rel (0) target = $region49
    $region48: #{tpu_custom_call.1} parent=1 // pred_region
      %1505 = dma.done [#allocation8], 32
    $region49: #{tpu_custom_call.1} parent=1 // pred_fallthru
      _
    %1506 = vsyncpa [#allocation7], 1
    %1507 = vsyncpa [#allocation10], 1
    %1508 = vsyncpa [#allocation8], 1

</llo_original>
